<compile_context>
chip_gen: v7x
topology: tpu7x:2x2x1
jax: 0.10.0
libtpu: 0.0.40
codegen_flags: <defaults>
</compile_context>

<pallas_src>
import functools

import numpy as np
import jax
import jax.numpy as jnp
from jax import lax
from jax.experimental import pallas as pl
from jax.experimental.pallas import tpu as pltpu

# ----------------------------------------------------------------------------
# "config" / charset (synthetic, deterministic — stands in for config.TIME_STEPS
# and stringToClasses from the original codebase)
# ----------------------------------------------------------------------------
TIME_STEPS = 16
ALPHABET = "abcdefghij"          # classes 1..10, class 0 is the CTC blank
NUM_CLASSES = len(ALPHABET) + 1

NEG = -1.0e30                    # log-space "-inf" sentinel


def string_to_classes(s):
    return np.array([ALPHABET.index(c) + 1 for c in s], dtype=np.int32)


# ----------------------------------------------------------------------------
# Pallas kernel: one (batch-tile, time-chunk) grid step of the CTC forward DP
# ----------------------------------------------------------------------------
def ctc_kernel(logp_ref, ext_ref, len_ref, loss_ref, alpha_ref):
    # logp_ref : (Tc, C, Nt) f32   log-probs, class-major, batch on lanes
    # ext_ref  : (Sp, Nt)   int32  blank-interleaved extended targets (padded)
    # len_ref  : (1, Nt)    int32  target lengths
    # loss_ref : (1, Nt)    f32    per-sample loss (written on last time chunk)
    # alpha_ref: (Sp, Nt)   f32    VMEM scratch: alpha carried across time chunks
    Tc, C, Nt = logp_ref.shape
    Sp = ext_ref.shape[0]
    neg = jnp.float32(NEG)

    lp = logp_ref[...]                       # (Tc, C, Nt)
    ext = ext_ref[...]                       # (Sp, Nt)
    lens = len_ref[...]                      # (1, Nt)

    # ---- per-tile structures, lane-dense in batch (tiny, off the DP chain) --
    s_iota = lax.broadcasted_iota(jnp.int32, (Sp, Nt), 0)
    valid = s_iota < (2 * lens + 1)                         # s < 2*len + 1
    ext_m2 = jnp.concatenate([ext[:2], ext[:-2]], axis=0)   # ext[s-2] (junk s<2)
    skip_ok = jnp.logical_and(
        s_iota >= 2, jnp.logical_and(ext != 0, ext != ext_m2))

    # ---- emission table hoisted out of the time recursion -------------------
    # em[t, s, n] = lp[t, ext[s, n], n]; even slots / padding have ext == 0
    # (blank), so the blank term is folded in for free.  One-hot MAC over the
    # class axis keeps this a pure VPU pass (no tiny MXU matmuls).
    c_iota = lax.broadcasted_iota(jnp.int32, (C, Sp, Nt), 0)
    onehot = (c_iota == ext[None]).astype(jnp.float32)       # (C, Sp, Nt)
    em = jnp.sum(lp[:, :, None, :] * onehot[None], axis=1)   # (Tc, Sp, Nt)

    # hoisted loop constants (JAX does not CSE broadcast_in_dim inside loops)
    neg1 = jnp.full((1, Nt), neg, dtype=jnp.float32)
    neg2 = jnp.full((2, Nt), neg, dtype=jnp.float32)

    def step(t, alpha):
        # alpha[s-1] / alpha[s-2]: sublane shifts along the extended-target axis
        a1 = jnp.concatenate([neg1, alpha[:-1]], axis=0)
        a2 = jnp.where(skip_ok,
                       jnp.concatenate([neg2, alpha[:-2]], axis=0), neg)
        m = jnp.maximum(alpha, jnp.maximum(a1, a2))
        lse = m + jnp.log(jnp.exp(alpha - m) + jnp.exp(a1 - m) + jnp.exp(a2 - m))
        return jnp.where(valid, em[t] + lse, neg)

    tc = pl.program_id(1)                     # time-chunk index ("arbitrary")

    @pl.when(tc == 0)
    def _first_chunk():
        # t = 0 init: alpha[0] = y_blank(0), alpha[1] = y_{tgt_0}(0)
        alpha = jnp.where(jnp.logical_and(s_iota <= 1, valid), em[0], neg)
        for t in range(1, Tc):                # fully unrolled recursion
            alpha = step(t, alpha)
        alpha_ref[...] = alpha

    @pl.when(tc > 0)
    def _later_chunk():
        alpha = alpha_ref[...]
        for t in range(Tc):                   # fully unrolled recursion
            alpha = step(t, alpha)
        alpha_ref[...] = alpha

    @pl.when(tc == pl.num_programs(1) - 1)
    def _finalize():
        alpha = alpha_ref[...]
        two_l = 2 * lens
        fin_mask = jnp.logical_or(s_iota == two_l, s_iota == two_l - 1)
        fin = jnp.where(fin_mask, alpha, neg)
        m = jnp.max(fin, axis=0, keepdims=True)
        logp_tot = m + jnp.log(jnp.sum(jnp.exp(fin - m), axis=0, keepdims=True))
        loss = jnp.where(logp_tot < jnp.float32(-1e29), 0.0, -logp_tot)  # zero_infinity
        loss_ref[...] = loss / jnp.maximum(lens, 1).astype(jnp.float32)


@functools.partial(jax.jit, static_argnames=("t_chunk",))
def ctc_loss_pallas(log_probs, ext_sn, lens_1n, *, t_chunk=8):
    T, N, C = log_probs.shape
    Sp = ext_sn.shape[0]
    if T % t_chunk != 0:
        t_chunk = T
    n_tc = T // t_chunk

    n_tile = N                    # batch tile = N here (use 128-wide at scale)
    n_bt = N // n_tile

    # layout plumbing: put batch on the lane axis -> (T, C, N)
    lp_tcn = jnp.transpose(log_probs.astype(jnp.float32), (0, 2, 1))

    per_sample = pl.pallas_call(
        ctc_kernel,
        out_shape=jax.ShapeDtypeStruct((1, N), jnp.float32),
        grid_spec=pltpu.PrefetchScalarGridSpec(
            num_scalar_prefetch=0,
            grid=(n_bt, n_tc),    # (batch tiles "parallel", time chunks "arbitrary")
            in_specs=[
                pl.BlockSpec((t_chunk, C, n_tile), lambda b, t: (t, 0, b)),
                pl.BlockSpec((Sp, n_tile), lambda b, t: (0, b)),
                pl.BlockSpec((1, n_tile), lambda b, t: (0, b)),
            ],
            out_specs=pl.BlockSpec((1, n_tile), lambda b, t: (0, b)),
            scratch_shapes=[pltpu.VMEM((Sp, n_tile), jnp.float32)],
        ),
        # batch axis megacore-shardable; time axis sequential (alpha carry).
        # Raise vmem_limit_bytes here when streaming large (T_chunk, C, N) tiles.
        compiler_params=pltpu.CompilerParams(
            dimension_semantics=("parallel", "arbitrary")),
    )(lp_tcn, ext_sn, lens_1n)

    # reduction='mean': per-sample loss already divided by target length
    return jnp.mean(per_sample)


# ----------------------------------------------------------------------------
# Python wrapper mirroring MyCTCLoss.forward (string targets -> classes, etc.)
# ----------------------------------------------------------------------------
def prepare_targets(target_strings):
    seqs = [string_to_classes(t) for t in target_strings]
    n = len(seqs)
    lengths = np.array([len(q) for q in seqs], dtype=np.int32)
    l_max = max(1, int(lengths.max()))
    s_ext = 2 * l_max + 1
    s_pad = ((s_ext + 7) // 8) * 8            # pad extended axis to sublanes
    ext = np.zeros((n, s_pad), dtype=np.int32)
    for i, q in enumerate(seqs):
        ext[i, 1:2 * len(q):2] = q            # blank-interleave: [_, c0, _, c1, ...]
    return jnp.asarray(ext.T), jnp.asarray(lengths.reshape(1, n))


def my_ctc_loss(outputs, targets):
    # outputs: (T, N, C) log-probabilities (time-major, as nn.CTCLoss expects);
    # targets: list of strings.
    # TODO(synk): output (input) lengths are fixed to TIME_STEPS == T for every
    # sample, exactly as in the original module; variable input_lengths < T are
    # not modelled.
    ext_sn, lens_1n = prepare_targets(targets)
    return ctc_loss_pallas(outputs, ext_sn, lens_1n)


# ----------------------------------------------------------------------------
# Pure-numpy reference (independent per-sample scalar DP) for validation
# ----------------------------------------------------------------------------
def ctc_ref_np(logp, target_seqs):
    T, N, C = logp.shape
    losses = []
    for n, tgt in enumerate(target_seqs):
        L = len(tgt)
        ext = [0]
        for c in tgt:
            ext += [int(c), 0]
        S = len(ext)
        alpha = np.full(S, NEG)
        alpha[0] = logp[0, n, 0]
        alpha[1] = logp[0, n, ext[1]]
        for t in range(1, T):
            new = np.full(S, NEG)
            for s in range(S):
                cands = [alpha[s]]
                if s >= 1:
                    cands.append(alpha[s - 1])
                if s >= 2 and ext[s] != 0 and ext[s] != ext[s - 2]:
                    cands.append(alpha[s - 2])
                m = max(cands)
                new[s] = m + np.log(sum(np.exp(c - m) for c in cands)) + logp[t, n, ext[s]]
            alpha = new
        m = max(alpha[S - 1], alpha[S - 2])
        tot = m + np.log(np.exp(alpha[S - 1] - m) + np.exp(alpha[S - 2] - m))
        loss = 0.0 if tot < -1e29 else -tot
        losses.append(loss / L)
    return float(np.mean(losses))


if __name__ == "__main__":
    key = jax.random.PRNGKey(0)
    # includes a repeated-letter target ("bee") to exercise the skip rule
    target_strings = ["cab", "face", "dig", "bee"]
    T, N, C = TIME_STEPS, len(target_strings), NUM_CLASSES

    logits = jax.random.normal(key, (T, N, C), dtype=jnp.float32)
    log_probs = jax.nn.log_softmax(logits, axis=-1)     # CTC expects log-probs

    loss = my_ctc_loss(log_probs, target_strings)
    loss = jax.block_until_ready(loss)

    ref = ctc_ref_np(np.asarray(log_probs),
                     [string_to_classes(s) for s in target_strings])
    assert np.isfinite(float(loss)), float(loss)
    assert abs(float(loss) - ref) < 1e-3 * max(1.0, abs(ref)), (float(loss), ref)
    print("KERNEL_OK")
</pallas_src>

<mosaic_0001>
module attributes {stable_mosaic.version = 11 : i64} {
  func.func @ctc_kernel(%arg0: i32, %arg1: i32, %arg2: memref<8x11x4xf32, #tpu.memory_space<vmem>>, %arg3: memref<16x4xi32, #tpu.memory_space<vmem>>, %arg4: memref<1x4xi32, #tpu.memory_space<vmem>>, %arg5: memref<1x4xf32, #tpu.memory_space<vmem>>, %arg6: memref<16x4xf32, #tpu.memory_space<vmem>>) attributes {dimension_semantics = [#tpu.dimension_semantics<parallel>, #tpu.dimension_semantics<arbitrary>], iteration_bounds = array<i64: 1, 2>, scalar_prefetch = 0 : i64, scratch_operands = 1 : i64, tpu.core_type = #tpu.core_type<tc>, window_params = [{transform_indices = @transform_0, window_bounds = array<i64: 8, 11, 4>}, {transform_indices = @transform_1, window_bounds = array<i64: 16, 4>}, {transform_indices = @transform_2, window_bounds = array<i64: 1, 4>}, {transform_indices = @transform_3, window_bounds = array<i64: 1, 4>}]} {
    %c0 = arith.constant 0 : index
    %c0_0 = arith.constant 0 : index
    %c0_1 = arith.constant 0 : index
    %0 = vector.load %arg2[%c0, %c0_0, %c0_1] : memref<8x11x4xf32, #tpu.memory_space<vmem>>, vector<8x11x4xf32>
    %c0_2 = arith.constant 0 : index
    %c0_3 = arith.constant 0 : index
    %1 = vector.load %arg3[%c0_2, %c0_3] : memref<16x4xi32, #tpu.memory_space<vmem>>, vector<16x4xi32>
    %c0_4 = arith.constant 0 : index
    %c0_5 = arith.constant 0 : index
    %2 = vector.load %arg4[%c0_4, %c0_5] : memref<1x4xi32, #tpu.memory_space<vmem>>, vector<1x4xi32>
    %3 = tpu.iota {dimensions = array<i32: 0>} : vector<16x4xi32>
    %c2_i32 = arith.constant 2 : i32
    %4 = vector.broadcast %c2_i32 : i32 to vector<1x4xi32>
    %5 = arith.muli %4, %2 : vector<1x4xi32>
    %c1_i32 = arith.constant 1 : i32
    %6 = vector.broadcast %c1_i32 : i32 to vector<1x4xi32>
    %7 = arith.addi %5, %6 : vector<1x4xi32>
    %8 = vector.broadcast %7 : vector<1x4xi32> to vector<16x4xi32>
    %9 = arith.cmpi slt, %3, %8 : vector<16x4xi32>
    %10 = vector.extract_strided_slice %1 {offsets = [0, 0], sizes = [2, 4], strides = [1, 1]} : vector<16x4xi32> to vector<2x4xi32>
    %11 = vector.extract_strided_slice %1 {offsets = [0, 0], sizes = [14, 4], strides = [1, 1]} : vector<16x4xi32> to vector<14x4xi32>
    %12 = tpu.concatenate %10, %11 in 0 : vector<2x4xi32>, vector<14x4xi32> -> vector<16x4xi32>
    %c2_i32_6 = arith.constant 2 : i32
    %13 = vector.broadcast %c2_i32_6 : i32 to vector<16x4xi32>
    %14 = arith.cmpi sge, %3, %13 : vector<16x4xi32>
    %c0_i32 = arith.constant 0 : i32
    %15 = vector.broadcast %c0_i32 : i32 to vector<16x4xi32>
    %16 = arith.cmpi ne, %1, %15 : vector<16x4xi32>
    %17 = arith.cmpi ne, %1, %12 : vector<16x4xi32>
    %18 = arith.andi %16, %17 : vector<16x4xi1>
    %19 = arith.andi %14, %18 : vector<16x4xi1>
    %20 = tpu.iota {dimensions = array<i32: 0>} : vector<11x16x4xi32>
    %21 = vector.shape_cast %1 : vector<16x4xi32> to vector<1x16x4xi32>
    %22 = vector.broadcast %21 : vector<1x16x4xi32> to vector<11x16x4xi32>
    %23 = arith.cmpi eq, %20, %22 : vector<11x16x4xi32>
    %24 = arith.extui %23 : vector<11x16x4xi1> to vector<11x16x4xi32>
    %25 = arith.sitofp %24 : vector<11x16x4xi32> to vector<11x16x4xf32>
    %26 = vector.shape_cast %0 : vector<8x11x4xf32> to vector<8x11x1x4xf32>
    %27 = vector.shape_cast %25 : vector<11x16x4xf32> to vector<1x11x16x4xf32>
    %28 = vector.broadcast %26 : vector<8x11x1x4xf32> to vector<8x11x16x4xf32>
    %29 = vector.broadcast %27 : vector<1x11x16x4xf32> to vector<8x11x16x4xf32>
    %30 = arith.mulf %28, %29 : vector<8x11x16x4xf32>
    %cst = arith.constant dense<0.000000e+00> : vector<8x16x4xf32>
    %31 = vector.multi_reduction <add>, %30, %cst [1] : vector<8x11x16x4xf32> to vector<8x16x4xf32>
    %cst_7 = arith.constant -1.000000e+30 : f32
    %32 = vector.broadcast %cst_7 : f32 to vector<1x4xf32>
    %cst_8 = arith.constant -1.000000e+30 : f32
    %33 = vector.broadcast %cst_8 : f32 to vector<2x4xf32>
    %c0_i32_9 = arith.constant 0 : i32
    %34 = arith.cmpi eq, %arg1, %c0_i32_9 : i32
    %35 = arith.extui %34 : i1 to i32
    %cst_10 = arith.constant -1.000000e+30 : f32
    %c0_i32_11 = arith.constant 0 : i32
    %36 = arith.cmpi ne, %35, %c0_i32_11 : i32
    scf.if %36 {
      %c1_i32_18 = arith.constant 1 : i32
      %43 = vector.broadcast %c1_i32_18 : i32 to vector<16x4xi32>
      %44 = arith.cmpi sle, %3, %43 : vector<16x4xi32>
      %45 = arith.andi %44, %9 : vector<16x4xi1>
      %46 = vector.extract_strided_slice %31 {offsets = [0, 0, 0], sizes = [1, 16, 4], strides = [1, 1, 1]} : vector<8x16x4xf32> to vector<1x16x4xf32>
      %47 = vector.shape_cast %46 : vector<1x16x4xf32> to vector<16x4xf32>
      %48 = vector.broadcast %cst_10 : f32 to vector<16x4xf32>
      %49 = arith.select %45, %47, %48 : vector<16x4xi1>, vector<16x4xf32>
      %50 = vector.extract_strided_slice %49 {offsets = [0, 0], sizes = [15, 4], strides = [1, 1]} : vector<16x4xf32> to vector<15x4xf32>
      %51 = tpu.concatenate %32, %50 in 0 : vector<1x4xf32>, vector<15x4xf32> -> vector<16x4xf32>
      %52 = vector.extract_strided_slice %49 {offsets = [0, 0], sizes = [14, 4], strides = [1, 1]} : vector<16x4xf32> to vector<14x4xf32>
      %53 = tpu.concatenate %33, %52 in 0 : vector<2x4xf32>, vector<14x4xf32> -> vector<16x4xf32>
      %54 = vector.broadcast %cst_10 : f32 to vector<16x4xf32>
      %55 = arith.select %19, %53, %54 : vector<16x4xi1>, vector<16x4xf32>
      %56 = arith.maximumf %51, %55 : vector<16x4xf32>
      %57 = arith.maximumf %49, %56 : vector<16x4xf32>
      %58 = arith.subf %49, %57 : vector<16x4xf32>
      %59 = math.exp %58 : vector<16x4xf32>
      %60 = arith.subf %51, %57 : vector<16x4xf32>
      %61 = math.exp %60 : vector<16x4xf32>
      %62 = arith.addf %59, %61 : vector<16x4xf32>
      %63 = arith.subf %55, %57 : vector<16x4xf32>
      %64 = math.exp %63 : vector<16x4xf32>
      %65 = arith.addf %62, %64 : vector<16x4xf32>
      %66 = math.log %65 : vector<16x4xf32>
      %67 = arith.addf %57, %66 : vector<16x4xf32>
      %68 = vector.extract_strided_slice %31 {offsets = [1, 0, 0], sizes = [1, 16, 4], strides = [1, 1, 1]} : vector<8x16x4xf32> to vector<1x16x4xf32>
      %69 = vector.shape_cast %68 : vector<1x16x4xf32> to vector<16x4xf32>
      %70 = arith.addf %69, %67 : vector<16x4xf32>
      %71 = vector.broadcast %cst_10 : f32 to vector<16x4xf32>
      %72 = arith.select %9, %70, %71 : vector<16x4xi1>, vector<16x4xf32>
      %73 = vector.extract_strided_slice %72 {offsets = [0, 0], sizes = [15, 4], strides = [1, 1]} : vector<16x4xf32> to vector<15x4xf32>
      %74 = tpu.concatenate %32, %73 in 0 : vector<1x4xf32>, vector<15x4xf32> -> vector<16x4xf32>
      %75 = vector.extract_strided_slice %72 {offsets = [0, 0], sizes = [14, 4], strides = [1, 1]} : vector<16x4xf32> to vector<14x4xf32>
      %76 = tpu.concatenate %33, %75 in 0 : vector<2x4xf32>, vector<14x4xf32> -> vector<16x4xf32>
      %77 = vector.broadcast %cst_10 : f32 to vector<16x4xf32>
      %78 = arith.select %19, %76, %77 : vector<16x4xi1>, vector<16x4xf32>
      %79 = arith.maximumf %74, %78 : vector<16x4xf32>
      %80 = arith.maximumf %72, %79 : vector<16x4xf32>
      %81 = arith.subf %72, %80 : vector<16x4xf32>
      %82 = math.exp %81 : vector<16x4xf32>
      %83 = arith.subf %74, %80 : vector<16x4xf32>
      %84 = math.exp %83 : vector<16x4xf32>
      %85 = arith.addf %82, %84 : vector<16x4xf32>
      %86 = arith.subf %78, %80 : vector<16x4xf32>
      %87 = math.exp %86 : vector<16x4xf32>
      %88 = arith.addf %85, %87 : vector<16x4xf32>
      %89 = math.log %88 : vector<16x4xf32>
      %90 = arith.addf %80, %89 : vector<16x4xf32>
      %91 = vector.extract_strided_slice %31 {offsets = [2, 0, 0], sizes = [1, 16, 4], strides = [1, 1, 1]} : vector<8x16x4xf32> to vector<1x16x4xf32>
      %92 = vector.shape_cast %91 : vector<1x16x4xf32> to vector<16x4xf32>
      %93 = arith.addf %92, %90 : vector<16x4xf32>
      %94 = vector.broadcast %cst_10 : f32 to vector<16x4xf32>
      %95 = arith.select %9, %93, %94 : vector<16x4xi1>, vector<16x4xf32>
      %96 = vector.extract_strided_slice %95 {offsets = [0, 0], sizes = [15, 4], strides = [1, 1]} : vector<16x4xf32> to vector<15x4xf32>
      %97 = tpu.concatenate %32, %96 in 0 : vector<1x4xf32>, vector<15x4xf32> -> vector<16x4xf32>
      %98 = vector.extract_strided_slice %95 {offsets = [0, 0], sizes = [14, 4], strides = [1, 1]} : vector<16x4xf32> to vector<14x4xf32>
      %99 = tpu.concatenate %33, %98 in 0 : vector<2x4xf32>, vector<14x4xf32> -> vector<16x4xf32>
      %100 = vector.broadcast %cst_10 : f32 to vector<16x4xf32>
      %101 = arith.select %19, %99, %100 : vector<16x4xi1>, vector<16x4xf32>
      %102 = arith.maximumf %97, %101 : vector<16x4xf32>
      %103 = arith.maximumf %95, %102 : vector<16x4xf32>
      %104 = arith.subf %95, %103 : vector<16x4xf32>
      %105 = math.exp %104 : vector<16x4xf32>
      %106 = arith.subf %97, %103 : vector<16x4xf32>
      %107 = math.exp %106 : vector<16x4xf32>
      %108 = arith.addf %105, %107 : vector<16x4xf32>
      %109 = arith.subf %101, %103 : vector<16x4xf32>
      %110 = math.exp %109 : vector<16x4xf32>
      %111 = arith.addf %108, %110 : vector<16x4xf32>
      %112 = math.log %111 : vector<16x4xf32>
      %113 = arith.addf %103, %112 : vector<16x4xf32>
      %114 = vector.extract_strided_slice %31 {offsets = [3, 0, 0], sizes = [1, 16, 4], strides = [1, 1, 1]} : vector<8x16x4xf32> to vector<1x16x4xf32>
      %115 = vector.shape_cast %114 : vector<1x16x4xf32> to vector<16x4xf32>
      %116 = arith.addf %115, %113 : vector<16x4xf32>
      %117 = vector.broadcast %cst_10 : f32 to vector<16x4xf32>
      %118 = arith.select %9, %116, %117 : vector<16x4xi1>, vector<16x4xf32>
      %119 = vector.extract_strided_slice %118 {offsets = [0, 0], sizes = [15, 4], strides = [1, 1]} : vector<16x4xf32> to vector<15x4xf32>
      %120 = tpu.concatenate %32, %119 in 0 : vector<1x4xf32>, vector<15x4xf32> -> vector<16x4xf32>
      %121 = vector.extract_strided_slice %118 {offsets = [0, 0], sizes = [14, 4], strides = [1, 1]} : vector<16x4xf32> to vector<14x4xf32>
      %122 = tpu.concatenate %33, %121 in 0 : vector<2x4xf32>, vector<14x4xf32> -> vector<16x4xf32>
      %123 = vector.broadcast %cst_10 : f32 to vector<16x4xf32>
      %124 = arith.select %19, %122, %123 : vector<16x4xi1>, vector<16x4xf32>
      %125 = arith.maximumf %120, %124 : vector<16x4xf32>
      %126 = arith.maximumf %118, %125 : vector<16x4xf32>
      %127 = arith.subf %118, %126 : vector<16x4xf32>
      %128 = math.exp %127 : vector<16x4xf32>
      %129 = arith.subf %120, %126 : vector<16x4xf32>
      %130 = math.exp %129 : vector<16x4xf32>
      %131 = arith.addf %128, %130 : vector<16x4xf32>
      %132 = arith.subf %124, %126 : vector<16x4xf32>
      %133 = math.exp %132 : vector<16x4xf32>
      %134 = arith.addf %131, %133 : vector<16x4xf32>
      %135 = math.log %134 : vector<16x4xf32>
      %136 = arith.addf %126, %135 : vector<16x4xf32>
      %137 = vector.extract_strided_slice %31 {offsets = [4, 0, 0], sizes = [1, 16, 4], strides = [1, 1, 1]} : vector<8x16x4xf32> to vector<1x16x4xf32>
      %138 = vector.shape_cast %137 : vector<1x16x4xf32> to vector<16x4xf32>
      %139 = arith.addf %138, %136 : vector<16x4xf32>
      %140 = vector.broadcast %cst_10 : f32 to vector<16x4xf32>
      %141 = arith.select %9, %139, %140 : vector<16x4xi1>, vector<16x4xf32>
      %142 = vector.extract_strided_slice %141 {offsets = [0, 0], sizes = [15, 4], strides = [1, 1]} : vector<16x4xf32> to vector<15x4xf32>
      %143 = tpu.concatenate %32, %142 in 0 : vector<1x4xf32>, vector<15x4xf32> -> vector<16x4xf32>
      %144 = vector.extract_strided_slice %141 {offsets = [0, 0], sizes = [14, 4], strides = [1, 1]} : vector<16x4xf32> to vector<14x4xf32>
      %145 = tpu.concatenate %33, %144 in 0 : vector<2x4xf32>, vector<14x4xf32> -> vector<16x4xf32>
      %146 = vector.broadcast %cst_10 : f32 to vector<16x4xf32>
      %147 = arith.select %19, %145, %146 : vector<16x4xi1>, vector<16x4xf32>
      %148 = arith.maximumf %143, %147 : vector<16x4xf32>
      %149 = arith.maximumf %141, %148 : vector<16x4xf32>
      %150 = arith.subf %141, %149 : vector<16x4xf32>
      %151 = math.exp %150 : vector<16x4xf32>
      %152 = arith.subf %143, %149 : vector<16x4xf32>
      %153 = math.exp %152 : vector<16x4xf32>
      %154 = arith.addf %151, %153 : vector<16x4xf32>
      %155 = arith.subf %147, %149 : vector<16x4xf32>
      %156 = math.exp %155 : vector<16x4xf32>
      %157 = arith.addf %154, %156 : vector<16x4xf32>
      %158 = math.log %157 : vector<16x4xf32>
      %159 = arith.addf %149, %158 : vector<16x4xf32>
      %160 = vector.extract_strided_slice %31 {offsets = [5, 0, 0], sizes = [1, 16, 4], strides = [1, 1, 1]} : vector<8x16x4xf32> to vector<1x16x4xf32>
      %161 = vector.shape_cast %160 : vector<1x16x4xf32> to vector<16x4xf32>
      %162 = arith.addf %161, %159 : vector<16x4xf32>
      %163 = vector.broadcast %cst_10 : f32 to vector<16x4xf32>
      %164 = arith.select %9, %162, %163 : vector<16x4xi1>, vector<16x4xf32>
      %165 = vector.extract_strided_slice %164 {offsets = [0, 0], sizes = [15, 4], strides = [1, 1]} : vector<16x4xf32> to vector<15x4xf32>
      %166 = tpu.concatenate %32, %165 in 0 : vector<1x4xf32>, vector<15x4xf32> -> vector<16x4xf32>
      %167 = vector.extract_strided_slice %164 {offsets = [0, 0], sizes = [14, 4], strides = [1, 1]} : vector<16x4xf32> to vector<14x4xf32>
      %168 = tpu.concatenate %33, %167 in 0 : vector<2x4xf32>, vector<14x4xf32> -> vector<16x4xf32>
      %169 = vector.broadcast %cst_10 : f32 to vector<16x4xf32>
      %170 = arith.select %19, %168, %169 : vector<16x4xi1>, vector<16x4xf32>
      %171 = arith.maximumf %166, %170 : vector<16x4xf32>
      %172 = arith.maximumf %164, %171 : vector<16x4xf32>
      %173 = arith.subf %164, %172 : vector<16x4xf32>
      %174 = math.exp %173 : vector<16x4xf32>
      %175 = arith.subf %166, %172 : vector<16x4xf32>
      %176 = math.exp %175 : vector<16x4xf32>
      %177 = arith.addf %174, %176 : vector<16x4xf32>
      %178 = arith.subf %170, %172 : vector<16x4xf32>
      %179 = math.exp %178 : vector<16x4xf32>
      %180 = arith.addf %177, %179 : vector<16x4xf32>
      %181 = math.log %180 : vector<16x4xf32>
      %182 = arith.addf %172, %181 : vector<16x4xf32>
      %183 = vector.extract_strided_slice %31 {offsets = [6, 0, 0], sizes = [1, 16, 4], strides = [1, 1, 1]} : vector<8x16x4xf32> to vector<1x16x4xf32>
      %184 = vector.shape_cast %183 : vector<1x16x4xf32> to vector<16x4xf32>
      %185 = arith.addf %184, %182 : vector<16x4xf32>
      %186 = vector.broadcast %cst_10 : f32 to vector<16x4xf32>
      %187 = arith.select %9, %185, %186 : vector<16x4xi1>, vector<16x4xf32>
      %188 = vector.extract_strided_slice %187 {offsets = [0, 0], sizes = [15, 4], strides = [1, 1]} : vector<16x4xf32> to vector<15x4xf32>
      %189 = tpu.concatenate %32, %188 in 0 : vector<1x4xf32>, vector<15x4xf32> -> vector<16x4xf32>
      %190 = vector.extract_strided_slice %187 {offsets = [0, 0], sizes = [14, 4], strides = [1, 1]} : vector<16x4xf32> to vector<14x4xf32>
      %191 = tpu.concatenate %33, %190 in 0 : vector<2x4xf32>, vector<14x4xf32> -> vector<16x4xf32>
      %192 = vector.broadcast %cst_10 : f32 to vector<16x4xf32>
      %193 = arith.select %19, %191, %192 : vector<16x4xi1>, vector<16x4xf32>
      %194 = arith.maximumf %189, %193 : vector<16x4xf32>
      %195 = arith.maximumf %187, %194 : vector<16x4xf32>
      %196 = arith.subf %187, %195 : vector<16x4xf32>
      %197 = math.exp %196 : vector<16x4xf32>
      %198 = arith.subf %189, %195 : vector<16x4xf32>
      %199 = math.exp %198 : vector<16x4xf32>
      %200 = arith.addf %197, %199 : vector<16x4xf32>
      %201 = arith.subf %193, %195 : vector<16x4xf32>
      %202 = math.exp %201 : vector<16x4xf32>
      %203 = arith.addf %200, %202 : vector<16x4xf32>
      %204 = math.log %203 : vector<16x4xf32>
      %205 = arith.addf %195, %204 : vector<16x4xf32>
      %206 = vector.extract_strided_slice %31 {offsets = [7, 0, 0], sizes = [1, 16, 4], strides = [1, 1, 1]} : vector<8x16x4xf32> to vector<1x16x4xf32>
      %207 = vector.shape_cast %206 : vector<1x16x4xf32> to vector<16x4xf32>
      %208 = arith.addf %207, %205 : vector<16x4xf32>
      %209 = vector.broadcast %cst_10 : f32 to vector<16x4xf32>
      %210 = arith.select %9, %208, %209 : vector<16x4xi1>, vector<16x4xf32>
      %c0_19 = arith.constant 0 : index
      %c0_20 = arith.constant 0 : index
      %211 = vector.load %arg6[%c0_19, %c0_20] : memref<16x4xf32, #tpu.memory_space<vmem>>, vector<16x4xf32>
      tpu.vector_store %arg6[%c0_19, %c0_20], %210 {strides = array<i32>} : memref<16x4xf32, #tpu.memory_space<vmem>>, vector<16x4xf32>,
    } else {
    }
    %c0_i32_12 = arith.constant 0 : i32
    %37 = arith.cmpi sgt, %arg1, %c0_i32_12 : i32
    %38 = arith.extui %37 : i1 to i32
    %cst_13 = arith.constant -1.000000e+30 : f32
    %c0_i32_14 = arith.constant 0 : i32
    %39 = arith.cmpi ne, %38, %c0_i32_14 : i32
    scf.if %39 {
      %c0_18 = arith.constant 0 : index
      %c0_19 = arith.constant 0 : index
      %43 = vector.load %arg6[%c0_18, %c0_19] : memref<16x4xf32, #tpu.memory_space<vmem>>, vector<16x4xf32>
      %44 = vector.extract_strided_slice %43 {offsets = [0, 0], sizes = [15, 4], strides = [1, 1]} : vector<16x4xf32> to vector<15x4xf32>
      %45 = tpu.concatenate %32, %44 in 0 : vector<1x4xf32>, vector<15x4xf32> -> vector<16x4xf32>
      %46 = vector.extract_strided_slice %43 {offsets = [0, 0], sizes = [14, 4], strides = [1, 1]} : vector<16x4xf32> to vector<14x4xf32>
      %47 = tpu.concatenate %33, %46 in 0 : vector<2x4xf32>, vector<14x4xf32> -> vector<16x4xf32>
      %48 = vector.broadcast %cst_13 : f32 to vector<16x4xf32>
      %49 = arith.select %19, %47, %48 : vector<16x4xi1>, vector<16x4xf32>
      %50 = arith.maximumf %45, %49 : vector<16x4xf32>
      %51 = arith.maximumf %43, %50 : vector<16x4xf32>
      %52 = arith.subf %43, %51 : vector<16x4xf32>
      %53 = math.exp %52 : vector<16x4xf32>
      %54 = arith.subf %45, %51 : vector<16x4xf32>
      %55 = math.exp %54 : vector<16x4xf32>
      %56 = arith.addf %53, %55 : vector<16x4xf32>
      %57 = arith.subf %49, %51 : vector<16x4xf32>
      %58 = math.exp %57 : vector<16x4xf32>
      %59 = arith.addf %56, %58 : vector<16x4xf32>
      %60 = math.log %59 : vector<16x4xf32>
      %61 = arith.addf %51, %60 : vector<16x4xf32>
      %62 = vector.extract_strided_slice %31 {offsets = [0, 0, 0], sizes = [1, 16, 4], strides = [1, 1, 1]} : vector<8x16x4xf32> to vector<1x16x4xf32>
      %63 = vector.shape_cast %62 : vector<1x16x4xf32> to vector<16x4xf32>
      %64 = arith.addf %63, %61 : vector<16x4xf32>
      %65 = vector.broadcast %cst_13 : f32 to vector<16x4xf32>
      %66 = arith.select %9, %64, %65 : vector<16x4xi1>, vector<16x4xf32>
      %67 = vector.extract_strided_slice %66 {offsets = [0, 0], sizes = [15, 4], strides = [1, 1]} : vector<16x4xf32> to vector<15x4xf32>
      %68 = tpu.concatenate %32, %67 in 0 : vector<1x4xf32>, vector<15x4xf32> -> vector<16x4xf32>
      %69 = vector.extract_strided_slice %66 {offsets = [0, 0], sizes = [14, 4], strides = [1, 1]} : vector<16x4xf32> to vector<14x4xf32>
      %70 = tpu.concatenate %33, %69 in 0 : vector<2x4xf32>, vector<14x4xf32> -> vector<16x4xf32>
      %71 = vector.broadcast %cst_13 : f32 to vector<16x4xf32>
      %72 = arith.select %19, %70, %71 : vector<16x4xi1>, vector<16x4xf32>
      %73 = arith.maximumf %68, %72 : vector<16x4xf32>
      %74 = arith.maximumf %66, %73 : vector<16x4xf32>
      %75 = arith.subf %66, %74 : vector<16x4xf32>
      %76 = math.exp %75 : vector<16x4xf32>
      %77 = arith.subf %68, %74 : vector<16x4xf32>
      %78 = math.exp %77 : vector<16x4xf32>
      %79 = arith.addf %76, %78 : vector<16x4xf32>
      %80 = arith.subf %72, %74 : vector<16x4xf32>
      %81 = math.exp %80 : vector<16x4xf32>
      %82 = arith.addf %79, %81 : vector<16x4xf32>
      %83 = math.log %82 : vector<16x4xf32>
      %84 = arith.addf %74, %83 : vector<16x4xf32>
      %85 = vector.extract_strided_slice %31 {offsets = [1, 0, 0], sizes = [1, 16, 4], strides = [1, 1, 1]} : vector<8x16x4xf32> to vector<1x16x4xf32>
      %86 = vector.shape_cast %85 : vector<1x16x4xf32> to vector<16x4xf32>
      %87 = arith.addf %86, %84 : vector<16x4xf32>
      %88 = vector.broadcast %cst_13 : f32 to vector<16x4xf32>
      %89 = arith.select %9, %87, %88 : vector<16x4xi1>, vector<16x4xf32>
      %90 = vector.extract_strided_slice %89 {offsets = [0, 0], sizes = [15, 4], strides = [1, 1]} : vector<16x4xf32> to vector<15x4xf32>
      %91 = tpu.concatenate %32, %90 in 0 : vector<1x4xf32>, vector<15x4xf32> -> vector<16x4xf32>
      %92 = vector.extract_strided_slice %89 {offsets = [0, 0], sizes = [14, 4], strides = [1, 1]} : vector<16x4xf32> to vector<14x4xf32>
      %93 = tpu.concatenate %33, %92 in 0 : vector<2x4xf32>, vector<14x4xf32> -> vector<16x4xf32>
      %94 = vector.broadcast %cst_13 : f32 to vector<16x4xf32>
      %95 = arith.select %19, %93, %94 : vector<16x4xi1>, vector<16x4xf32>
      %96 = arith.maximumf %91, %95 : vector<16x4xf32>
      %97 = arith.maximumf %89, %96 : vector<16x4xf32>
      %98 = arith.subf %89, %97 : vector<16x4xf32>
      %99 = math.exp %98 : vector<16x4xf32>
      %100 = arith.subf %91, %97 : vector<16x4xf32>
      %101 = math.exp %100 : vector<16x4xf32>
      %102 = arith.addf %99, %101 : vector<16x4xf32>
      %103 = arith.subf %95, %97 : vector<16x4xf32>
      %104 = math.exp %103 : vector<16x4xf32>
      %105 = arith.addf %102, %104 : vector<16x4xf32>
      %106 = math.log %105 : vector<16x4xf32>
      %107 = arith.addf %97, %106 : vector<16x4xf32>
      %108 = vector.extract_strided_slice %31 {offsets = [2, 0, 0], sizes = [1, 16, 4], strides = [1, 1, 1]} : vector<8x16x4xf32> to vector<1x16x4xf32>
      %109 = vector.shape_cast %108 : vector<1x16x4xf32> to vector<16x4xf32>
      %110 = arith.addf %109, %107 : vector<16x4xf32>
      %111 = vector.broadcast %cst_13 : f32 to vector<16x4xf32>
      %112 = arith.select %9, %110, %111 : vector<16x4xi1>, vector<16x4xf32>
      %113 = vector.extract_strided_slice %112 {offsets = [0, 0], sizes = [15, 4], strides = [1, 1]} : vector<16x4xf32> to vector<15x4xf32>
      %114 = tpu.concatenate %32, %113 in 0 : vector<1x4xf32>, vector<15x4xf32> -> vector<16x4xf32>
      %115 = vector.extract_strided_slice %112 {offsets = [0, 0], sizes = [14, 4], strides = [1, 1]} : vector<16x4xf32> to vector<14x4xf32>
      %116 = tpu.concatenate %33, %115 in 0 : vector<2x4xf32>, vector<14x4xf32> -> vector<16x4xf32>
      %117 = vector.broadcast %cst_13 : f32 to vector<16x4xf32>
      %118 = arith.select %19, %116, %117 : vector<16x4xi1>, vector<16x4xf32>
      %119 = arith.maximumf %114, %118 : vector<16x4xf32>
      %120 = arith.maximumf %112, %119 : vector<16x4xf32>
      %121 = arith.subf %112, %120 : vector<16x4xf32>
      %122 = math.exp %121 : vector<16x4xf32>
      %123 = arith.subf %114, %120 : vector<16x4xf32>
      %124 = math.exp %123 : vector<16x4xf32>
      %125 = arith.addf %122, %124 : vector<16x4xf32>
      %126 = arith.subf %118, %120 : vector<16x4xf32>
      %127 = math.exp %126 : vector<16x4xf32>
      %128 = arith.addf %125, %127 : vector<16x4xf32>
      %129 = math.log %128 : vector<16x4xf32>
      %130 = arith.addf %120, %129 : vector<16x4xf32>
      %131 = vector.extract_strided_slice %31 {offsets = [3, 0, 0], sizes = [1, 16, 4], strides = [1, 1, 1]} : vector<8x16x4xf32> to vector<1x16x4xf32>
      %132 = vector.shape_cast %131 : vector<1x16x4xf32> to vector<16x4xf32>
      %133 = arith.addf %132, %130 : vector<16x4xf32>
      %134 = vector.broadcast %cst_13 : f32 to vector<16x4xf32>
      %135 = arith.select %9, %133, %134 : vector<16x4xi1>, vector<16x4xf32>
      %136 = vector.extract_strided_slice %135 {offsets = [0, 0], sizes = [15, 4], strides = [1, 1]} : vector<16x4xf32> to vector<15x4xf32>
      %137 = tpu.concatenate %32, %136 in 0 : vector<1x4xf32>, vector<15x4xf32> -> vector<16x4xf32>
      %138 = vector.extract_strided_slice %135 {offsets = [0, 0], sizes = [14, 4], strides = [1, 1]} : vector<16x4xf32> to vector<14x4xf32>
      %139 = tpu.concatenate %33, %138 in 0 : vector<2x4xf32>, vector<14x4xf32> -> vector<16x4xf32>
      %140 = vector.broadcast %cst_13 : f32 to vector<16x4xf32>
      %141 = arith.select %19, %139, %140 : vector<16x4xi1>, vector<16x4xf32>
      %142 = arith.maximumf %137, %141 : vector<16x4xf32>
      %143 = arith.maximumf %135, %142 : vector<16x4xf32>
      %144 = arith.subf %135, %143 : vector<16x4xf32>
      %145 = math.exp %144 : vector<16x4xf32>
      %146 = arith.subf %137, %143 : vector<16x4xf32>
      %147 = math.exp %146 : vector<16x4xf32>
      %148 = arith.addf %145, %147 : vector<16x4xf32>
      %149 = arith.subf %141, %143 : vector<16x4xf32>
      %150 = math.exp %149 : vector<16x4xf32>
      %151 = arith.addf %148, %150 : vector<16x4xf32>
      %152 = math.log %151 : vector<16x4xf32>
      %153 = arith.addf %143, %152 : vector<16x4xf32>
      %154 = vector.extract_strided_slice %31 {offsets = [4, 0, 0], sizes = [1, 16, 4], strides = [1, 1, 1]} : vector<8x16x4xf32> to vector<1x16x4xf32>
      %155 = vector.shape_cast %154 : vector<1x16x4xf32> to vector<16x4xf32>
      %156 = arith.addf %155, %153 : vector<16x4xf32>
      %157 = vector.broadcast %cst_13 : f32 to vector<16x4xf32>
      %158 = arith.select %9, %156, %157 : vector<16x4xi1>, vector<16x4xf32>
      %159 = vector.extract_strided_slice %158 {offsets = [0, 0], sizes = [15, 4], strides = [1, 1]} : vector<16x4xf32> to vector<15x4xf32>
      %160 = tpu.concatenate %32, %159 in 0 : vector<1x4xf32>, vector<15x4xf32> -> vector<16x4xf32>
      %161 = vector.extract_strided_slice %158 {offsets = [0, 0], sizes = [14, 4], strides = [1, 1]} : vector<16x4xf32> to vector<14x4xf32>
      %162 = tpu.concatenate %33, %161 in 0 : vector<2x4xf32>, vector<14x4xf32> -> vector<16x4xf32>
      %163 = vector.broadcast %cst_13 : f32 to vector<16x4xf32>
      %164 = arith.select %19, %162, %163 : vector<16x4xi1>, vector<16x4xf32>
      %165 = arith.maximumf %160, %164 : vector<16x4xf32>
      %166 = arith.maximumf %158, %165 : vector<16x4xf32>
      %167 = arith.subf %158, %166 : vector<16x4xf32>
      %168 = math.exp %167 : vector<16x4xf32>
      %169 = arith.subf %160, %166 : vector<16x4xf32>
      %170 = math.exp %169 : vector<16x4xf32>
      %171 = arith.addf %168, %170 : vector<16x4xf32>
      %172 = arith.subf %164, %166 : vector<16x4xf32>
      %173 = math.exp %172 : vector<16x4xf32>
      %174 = arith.addf %171, %173 : vector<16x4xf32>
      %175 = math.log %174 : vector<16x4xf32>
      %176 = arith.addf %166, %175 : vector<16x4xf32>
      %177 = vector.extract_strided_slice %31 {offsets = [5, 0, 0], sizes = [1, 16, 4], strides = [1, 1, 1]} : vector<8x16x4xf32> to vector<1x16x4xf32>
      %178 = vector.shape_cast %177 : vector<1x16x4xf32> to vector<16x4xf32>
      %179 = arith.addf %178, %176 : vector<16x4xf32>
      %180 = vector.broadcast %cst_13 : f32 to vector<16x4xf32>
      %181 = arith.select %9, %179, %180 : vector<16x4xi1>, vector<16x4xf32>
      %182 = vector.extract_strided_slice %181 {offsets = [0, 0], sizes = [15, 4], strides = [1, 1]} : vector<16x4xf32> to vector<15x4xf32>
      %183 = tpu.concatenate %32, %182 in 0 : vector<1x4xf32>, vector<15x4xf32> -> vector<16x4xf32>
      %184 = vector.extract_strided_slice %181 {offsets = [0, 0], sizes = [14, 4], strides = [1, 1]} : vector<16x4xf32> to vector<14x4xf32>
      %185 = tpu.concatenate %33, %184 in 0 : vector<2x4xf32>, vector<14x4xf32> -> vector<16x4xf32>
      %186 = vector.broadcast %cst_13 : f32 to vector<16x4xf32>
      %187 = arith.select %19, %185, %186 : vector<16x4xi1>, vector<16x4xf32>
      %188 = arith.maximumf %183, %187 : vector<16x4xf32>
      %189 = arith.maximumf %181, %188 : vector<16x4xf32>
      %190 = arith.subf %181, %189 : vector<16x4xf32>
      %191 = math.exp %190 : vector<16x4xf32>
      %192 = arith.subf %183, %189 : vector<16x4xf32>
      %193 = math.exp %192 : vector<16x4xf32>
      %194 = arith.addf %191, %193 : vector<16x4xf32>
      %195 = arith.subf %187, %189 : vector<16x4xf32>
      %196 = math.exp %195 : vector<16x4xf32>
      %197 = arith.addf %194, %196 : vector<16x4xf32>
      %198 = math.log %197 : vector<16x4xf32>
      %199 = arith.addf %189, %198 : vector<16x4xf32>
      %200 = vector.extract_strided_slice %31 {offsets = [6, 0, 0], sizes = [1, 16, 4], strides = [1, 1, 1]} : vector<8x16x4xf32> to vector<1x16x4xf32>
      %201 = vector.shape_cast %200 : vector<1x16x4xf32> to vector<16x4xf32>
      %202 = arith.addf %201, %199 : vector<16x4xf32>
      %203 = vector.broadcast %cst_13 : f32 to vector<16x4xf32>
      %204 = arith.select %9, %202, %203 : vector<16x4xi1>, vector<16x4xf32>
      %205 = vector.extract_strided_slice %204 {offsets = [0, 0], sizes = [15, 4], strides = [1, 1]} : vector<16x4xf32> to vector<15x4xf32>
      %206 = tpu.concatenate %32, %205 in 0 : vector<1x4xf32>, vector<15x4xf32> -> vector<16x4xf32>
      %207 = vector.extract_strided_slice %204 {offsets = [0, 0], sizes = [14, 4], strides = [1, 1]} : vector<16x4xf32> to vector<14x4xf32>
      %208 = tpu.concatenate %33, %207 in 0 : vector<2x4xf32>, vector<14x4xf32> -> vector<16x4xf32>
      %209 = vector.broadcast %cst_13 : f32 to vector<16x4xf32>
      %210 = arith.select %19, %208, %209 : vector<16x4xi1>, vector<16x4xf32>
      %211 = arith.maximumf %206, %210 : vector<16x4xf32>
      %212 = arith.maximumf %204, %211 : vector<16x4xf32>
      %213 = arith.subf %204, %212 : vector<16x4xf32>
      %214 = math.exp %213 : vector<16x4xf32>
      %215 = arith.subf %206, %212 : vector<16x4xf32>
      %216 = math.exp %215 : vector<16x4xf32>
      %217 = arith.addf %214, %216 : vector<16x4xf32>
      %218 = arith.subf %210, %212 : vector<16x4xf32>
      %219 = math.exp %218 : vector<16x4xf32>
      %220 = arith.addf %217, %219 : vector<16x4xf32>
      %221 = math.log %220 : vector<16x4xf32>
      %222 = arith.addf %212, %221 : vector<16x4xf32>
      %223 = vector.extract_strided_slice %31 {offsets = [7, 0, 0], sizes = [1, 16, 4], strides = [1, 1, 1]} : vector<8x16x4xf32> to vector<1x16x4xf32>
      %224 = vector.shape_cast %223 : vector<1x16x4xf32> to vector<16x4xf32>
      %225 = arith.addf %224, %222 : vector<16x4xf32>
      %226 = vector.broadcast %cst_13 : f32 to vector<16x4xf32>
      %227 = arith.select %9, %225, %226 : vector<16x4xi1>, vector<16x4xf32>
      %c0_20 = arith.constant 0 : index
      %c0_21 = arith.constant 0 : index
      %228 = vector.load %arg6[%c0_20, %c0_21] : memref<16x4xf32, #tpu.memory_space<vmem>>, vector<16x4xf32>
      tpu.vector_store %arg6[%c0_20, %c0_21], %227 {strides = array<i32>} : memref<16x4xf32, #tpu.memory_space<vmem>>, vector<16x4xf32>,
    } else {
    }
    %c1_i32_15 = arith.constant 1 : i32
    %40 = arith.cmpi eq, %arg1, %c1_i32_15 : i32
    %41 = arith.extui %40 : i1 to i32
    %cst_16 = arith.constant -1.000000e+30 : f32
    %c0_i32_17 = arith.constant 0 : i32
    %42 = arith.cmpi ne, %41, %c0_i32_17 : i32
    scf.if %42 {
      %c0_18 = arith.constant 0 : index
      %c0_19 = arith.constant 0 : index
      %43 = vector.load %arg6[%c0_18, %c0_19] : memref<16x4xf32, #tpu.memory_space<vmem>>, vector<16x4xf32>
      %c2_i32_20 = arith.constant 2 : i32
      %44 = vector.broadcast %c2_i32_20 : i32 to vector<1x4xi32>
      %45 = arith.muli %44, %2 : vector<1x4xi32>
      %46 = vector.broadcast %45 : vector<1x4xi32> to vector<16x4xi32>
      %47 = arith.cmpi eq, %3, %46 : vector<16x4xi32>
      %c1_i32_21 = arith.constant 1 : i32
      %48 = vector.broadcast %c1_i32_21 : i32 to vector<1x4xi32>
      %49 = arith.subi %45, %48 : vector<1x4xi32>
      %50 = vector.broadcast %49 : vector<1x4xi32> to vector<16x4xi32>
      %51 = arith.cmpi eq, %3, %50 : vector<16x4xi32>
      %52 = arith.ori %47, %51 : vector<16x4xi1>
      %53 = vector.broadcast %cst_16 : f32 to vector<16x4xf32>
      %54 = arith.select %52, %43, %53 : vector<16x4xi1>, vector<16x4xf32>
      %cst_22 = arith.constant dense<0xFF800000> : vector<4xf32>
      %55 = vector.multi_reduction <maximumf>, %54, %cst_22 [0] : vector<16x4xf32> to vector<4xf32>
      %56 = vector.shape_cast %55 : vector<4xf32> to vector<1x4xf32>
      %57 = vector.broadcast %56 : vector<1x4xf32> to vector<16x4xf32>
      %58 = arith.subf %54, %57 : vector<16x4xf32>
      %59 = math.exp %58 : vector<16x4xf32>
      %cst_23 = arith.constant dense<0.000000e+00> : vector<4xf32>
      %60 = vector.multi_reduction <add>, %59, %cst_23 [0] : vector<16x4xf32> to vector<4xf32>
      %61 = vector.shape_cast %60 : vector<4xf32> to vector<1x4xf32>
      %62 = math.log %61 : vector<1x4xf32>
      %63 = arith.addf %56, %62 : vector<1x4xf32>
      %cst_24 = arith.constant -1.000000e+29 : f32
      %64 = vector.broadcast %cst_24 : f32 to vector<1x4xf32>
      %65 = arith.cmpf olt, %63, %64 : vector<1x4xf32>
      %cst_25 = arith.constant 0.000000e+00 : f32
      %66 = vector.broadcast %cst_25 : f32 to vector<1x4xf32>
      %67 = arith.subf %66, %63 : vector<1x4xf32>
      %cst_26 = arith.constant 0.000000e+00 : f32
      %68 = vector.broadcast %cst_26 : f32 to vector<1x4xf32>
      %69 = arith.select %65, %68, %67 : vector<1x4xi1>, vector<1x4xf32>
      %c1_i32_27 = arith.constant 1 : i32
      %70 = vector.broadcast %c1_i32_27 : i32 to vector<1x4xi32>
      %71 = arith.maxsi %2, %70 : vector<1x4xi32>
      %72 = arith.sitofp %71 : vector<1x4xi32> to vector<1x4xf32>
      %73 = arith.divf %69, %72 : vector<1x4xf32>
      %c0_28 = arith.constant 0 : index
      %c0_29 = arith.constant 0 : index
      %74 = vector.load %arg5[%c0_28, %c0_29] : memref<1x4xf32, #tpu.memory_space<vmem>>, vector<1x4xf32>
      tpu.vector_store %arg5[%c0_28, %c0_29], %73 {strides = array<i32>} : memref<1x4xf32, #tpu.memory_space<vmem>>, vector<1x4xf32>,
    } else {
    }
    return
  }
  func.func @transform_0(%arg0: i32, %arg1: i32) -> (i32, i32, i32) {
    %c0_i32 = arith.constant 0 : i32
    %c0_i32_0 = arith.constant 0 : i32
    return %arg1, %c0_i32, %arg0 : i32, i32, i32
  }
  func.func @transform_1(%arg0: i32, %arg1: i32) -> (i32, i32) {
    %c0_i32 = arith.constant 0 : i32
    %c0_i32_0 = arith.constant 0 : i32
    return %c0_i32, %arg0 : i32, i32
  }
  func.func @transform_2(%arg0: i32, %arg1: i32) -> (i32, i32) {
    %c0_i32 = arith.constant 0 : i32
    %c0_i32_0 = arith.constant 0 : i32
    return %c0_i32, %arg0 : i32, i32
  }
  func.func @transform_3(%arg0: i32, %arg1: i32) -> (i32, i32) {
    %c0_i32 = arith.constant 0 : i32
    %c0_i32_0 = arith.constant 0 : i32
    return %c0_i32, %arg0 : i32, i32
  }
}

</mosaic_0001>

<llo_original>
// kernel: ctc_loss_pallas.1
$region0: #{ctc_loss_pallas.1}
  #allocation0 [shape = 'u32[]', space=smem, size = 0x4, offset = 0x4, fixed_abs, tag = 'smem constant byte address 0x4 - core index']
  #allocation1 [shape = 'u32[144,128]{1,0:T(1,128)}', space=vmem, size = 0x12000, scoped, tag = 'internal scratch']
  #allocation2 [shape = 'f32[16,4]{1,0:T(8,128)}', space=vmem, size = 0x2000, scoped, tag = 'scratch operand']
  %s0 = inlined_call_operand.vmem [shape: f32[16,11,4], index: 0, kind: input, shape index: {}]
  %s1 = inlined_call_operand.vmem [shape: s32[16,4], index: 1, kind: input, shape index: {}]
  %s2 = inlined_call_operand.vmem [shape: s32[1,4], index: 2, kind: input, shape index: {}]
  %s3 = inlined_call_operand.vmem [shape: f32[1,4], index: 3, kind: output, shape index: {}]
  %s4 = sld [smem:[#allocation0]]
  $region57: #{ctc_loss_pallas.1} parent=0
    _
  %s6 = ssub.s32 1, %s4
  %s7 = scalar_select 0, %s6, %s4
  loop: start=0, step=1, limit=4
  $region2: #{ctc_loss_pallas.1} parent=0 // loop_pre_header
    _
  $region3: #{ctc_loss_pallas.1} parent=0 // loop_header
    %s9 = sphi 0, %s13
    %p10 = scmp.ge.s32.totalorder %s9, 4
    %s16 = sphi 0, %s28
    %s17 = sphi 0, %s24
    %s18 = sphi 0, %s16
    %s19 = sphi 0, %s17
    %s20 = sphi 0, %s18
    %s21 = sphi 0, %s19
    %s33 = sphi 0, %s35
    %s36 = sphi 0, %s33
    %s37 = sphi 0, %s36
    %s53 = sphi 0, %s37
    %s59 = sphi 0, %s61
    %s62 = sphi 0, %s59
    %s63 = sphi 0, %s62
    %s79 = sphi 0, %s63
    %s85 = sphi 0, %s87
    %s88 = sphi 0, %s85
    %s89 = sphi 0, %s88
    %s105 = sphi 0, %s89
    %s111 = sphi 0, %s113
    %s114 = sphi 0, %s111
    %s115 = sphi 0, %s114
    %s131 = sphi 0, %s115
  $region4: #{ctc_loss_pallas.1} parent=0 // loop_header_branch
    %12 = sbr.rel (%p10) target = $region8
  $region5: #{ctc_loss_pallas.1} parent=0 // loop_body
    %s14 = ssub.s32 %s9, 1
    %s15 = ssub.s32 %s9, 2
    %s22 = sadd.s32 1, %s17
    %p23 = scmp.ge.s32.totalorder %s22, 2
    %s24 = scalar_select %p23, 0, %s22
    %s25 = sadd.s32 1, %s16
    %s26 = scalar_select %p23, %s25, %s16
    %p27 = scmp.ge.s32.totalorder %s26, 1
    %s28 = scalar_select %p27, 0, %s26
    %s29 = ssub.s32 %s17, %s24
    %s30 = ssub.s32 %s16, %s28
    %s31 = sor.u32 %s29, %s30
    %p32 = scmp.eq.s32.totalorder %s31, 0
    %s34 = sadd.s32 %s33, 1
    %s35 = scalar_select %p32, %s33, %s34
    %p38 = pneg %p32
    %p39 = scmp.eq.s32.totalorder %s9, 1
    %p40 = por %p38, %p39
    %p41 = scmp.ne.s32.totalorder %s33, %s36
    %p42 = scmp.eq.s32.totalorder %s9, 0
    %p43 = por %p41, %p42
    %p44 = scmp.ne.s32.totalorder %s33, %s36
    %p45 = scmp.eq.s32.totalorder %s14, 1
    %p46 = por %p44, %p45
    %p47 = scmp.ne.s32.totalorder %s36, %s37
    %p48 = scmp.eq.s32.totalorder %s14, 0
    %p49 = por %p47, %p48
    %p50 = scmp.ne.s32.totalorder %s36, %s37
    %p51 = scmp.eq.s32.totalorder %s15, 1
    %p52 = por %p50, %p51
    %p54 = scmp.ne.s32.totalorder %s37, %s53
    %p55 = scmp.eq.s32.totalorder %s15, 0
    %p56 = por %p54, %p55
    %s57 = ssub.s32 %s16, %s28
    %p58 = scmp.eq.s32.totalorder %s57, 0
    %s60 = sadd.s32 %s59, 1
    %s61 = scalar_select %p58, %s59, %s60
    %p64 = pneg %p58
    %p65 = scmp.eq.s32.totalorder %s9, 1
    %p66 = por %p64, %p65
    %p67 = scmp.ne.s32.totalorder %s59, %s62
    %p68 = scmp.eq.s32.totalorder %s9, 0
    %p69 = por %p67, %p68
    %p70 = scmp.ne.s32.totalorder %s59, %s62
    %p71 = scmp.eq.s32.totalorder %s14, 1
    %p72 = por %p70, %p71
    %p73 = scmp.ne.s32.totalorder %s62, %s63
    %p74 = scmp.eq.s32.totalorder %s14, 0
    %p75 = por %p73, %p74
    %p76 = scmp.ne.s32.totalorder %s62, %s63
    %p77 = scmp.eq.s32.totalorder %s15, 1
    %p78 = por %p76, %p77
    %p80 = scmp.ne.s32.totalorder %s63, %s79
    %p81 = scmp.eq.s32.totalorder %s15, 0
    %p82 = por %p80, %p81
    %s83 = ssub.s32 %s16, %s28
    %p84 = scmp.eq.s32.totalorder %s83, 0
    %s86 = sadd.s32 %s85, 1
    %s87 = scalar_select %p84, %s85, %s86
    %p90 = pneg %p84
    %p91 = scmp.eq.s32.totalorder %s9, 1
    %p92 = por %p90, %p91
    %p93 = scmp.ne.s32.totalorder %s85, %s88
    %p94 = scmp.eq.s32.totalorder %s9, 0
    %p95 = por %p93, %p94
    %p96 = scmp.ne.s32.totalorder %s85, %s88
    %p97 = scmp.eq.s32.totalorder %s14, 1
    %p98 = por %p96, %p97
    %p99 = scmp.ne.s32.totalorder %s88, %s89
    %p100 = scmp.eq.s32.totalorder %s14, 0
    %p101 = por %p99, %p100
    %p102 = scmp.ne.s32.totalorder %s88, %s89
    %p103 = scmp.eq.s32.totalorder %s15, 1
    %p104 = por %p102, %p103
    %p106 = scmp.ne.s32.totalorder %s89, %s105
    %p107 = scmp.eq.s32.totalorder %s15, 0
    %p108 = por %p106, %p107
    %s109 = ssub.s32 %s16, %s28
    %p110 = scmp.eq.s32.totalorder %s109, 0
    %s112 = sadd.s32 %s111, 1
    %s113 = scalar_select %p110, %s111, %s112
    %p116 = pneg %p110
    %p117 = scmp.eq.s32.totalorder %s9, 1
    %p118 = por %p116, %p117
    %p119 = scmp.ne.s32.totalorder %s111, %s114
    %p120 = scmp.eq.s32.totalorder %s9, 0
    %p121 = por %p119, %p120
    %p122 = scmp.ne.s32.totalorder %s111, %s114
    %p123 = scmp.eq.s32.totalorder %s14, 1
    %p124 = por %p122, %p123
    %p125 = scmp.ne.s32.totalorder %s114, %s115
    %p126 = scmp.eq.s32.totalorder %s14, 0
    %p127 = por %p125, %p126
    %p128 = scmp.ne.s32.totalorder %s114, %s115
    %p129 = scmp.eq.s32.totalorder %s15, 1
    %p130 = por %p128, %p129
    %p132 = scmp.ne.s32.totalorder %s115, %s131
    %p133 = scmp.eq.s32.totalorder %s15, 0
    %p134 = por %p132, %p133
    %p135 = scmp.le.s32.totalorder 1, %s9
    %p136 = scmp.lt.s32.totalorder %s9, 3
    %p137 = pnand %p135, %p136
    %p138 = pneg %p137
    // Predicated region
    $region9: #{ctc_loss_pallas.1} parent=5 // pred_check
      _
    $region10: #{ctc_loss_pallas.1} parent=5 // pred_check_branch
      %140 = sbr.rel (%p137) target = $region12
    $region11: #{ctc_loss_pallas.1} parent=5 // pred_region
      %s141 = ssub.s32 %s9, 1
      // Predicated region
      $region13: #{ctc_loss_pallas.1} parent=11 // pred_check
        %p142 = pneg %p75
      $region14: #{ctc_loss_pallas.1} parent=11 // pred_check_branch
        %144 = sbr.rel (%p142) target = $region16
      $region15: #{ctc_loss_pallas.1} parent=11 // pred_region
        %p145 = scmp.lt.s32.totalorder %s18, 0
        %s146 = scalar_select %p145, %s18, 0
        %s147 = smul.addr %s146, 8
        %s148 = scalar_lea.vmem %s1, %s147
      $region16: #{ctc_loss_pallas.1} parent=11 // pred_fallthru
        _
      // Predicated region
      $region17: #{ctc_loss_pallas.1} parent=11 // pred_check
        %p149 = pneg %p101
      $region18: #{ctc_loss_pallas.1} parent=11 // pred_check_branch
        %151 = sbr.rel (%p149) target = $region20
      $region19: #{ctc_loss_pallas.1} parent=11 // pred_region
        %p152 = scmp.lt.s32.totalorder %s18, 0
        %s153 = scalar_select %p152, %s18, 0
        %s154 = scalar_lea.vmem %s2, %s153
      $region20: #{ctc_loss_pallas.1} parent=11 // pred_fallthru
        _
    $region12: #{ctc_loss_pallas.1} parent=5 // pred_fallthru
      _
    %p155 = scmp.lt.s32.totalorder %s9, 2
    // Predicated region
    $region21: #{ctc_loss_pallas.1} parent=5 // pred_check
      %p156 = pneg %p155
    $region22: #{ctc_loss_pallas.1} parent=5 // pred_check_branch
      %158 = sbr.rel (%p156) target = $region24
    $region23: #{ctc_loss_pallas.1} parent=5 // pred_region
      // Predicated region
      $region25: #{ctc_loss_pallas.1} parent=23 // pred_check
        %p159 = pneg %p43
      $region26: #{ctc_loss_pallas.1} parent=23 // pred_check_branch
        %161 = sbr.rel (%p159) target = $region28
      $region27: #{ctc_loss_pallas.1} parent=23 // pred_region
        %s162 = smul.u32 8, %s17
        %p163 = scmp.lt.s32.totalorder %s162, 15
        %s164 = scalar_select %p163, %s162, 15
        %p165 = scmp.lt.s32.totalorder %s16, 0
        %s166 = scalar_select %p165, %s16, 0
        %s167 = smul.addr %s164, 2
        %s168 = sadd.s32 %s166, %s167
        %s169 = smul.addr %s168, 8
        %s170 = scalar_lea.vmem %s0, %s169
        %s171 = smul.u32 8, %s17
      $region28: #{ctc_loss_pallas.1} parent=23 // pred_fallthru
        _
    $region24: #{ctc_loss_pallas.1} parent=5 // pred_fallthru
      _
    %p172 = scmp.le.s32.totalorder 1, %s9
    %p173 = scmp.lt.s32.totalorder %s9, 3
    %p174 = pnand %p172, %p173
    %p175 = pneg %p174
    // Predicated region
    $region29: #{ctc_loss_pallas.1} parent=5 // pred_check
      _
    $region30: #{ctc_loss_pallas.1} parent=5 // pred_check_branch
      %177 = sbr.rel (%p174) target = $region32
    $region31: #{ctc_loss_pallas.1} parent=5 // pred_region
      %s178 = ssub.s32 %s9, 1
      %s179 = smul.u32 8, %s19
      %p180 = scmp.lt.s32.totalorder %s179, 15
      %s181 = scalar_select %p180, %s179, 15
      %p182 = scmp.lt.s32.totalorder %s18, 0
      %s183 = scalar_select %p182, %s18, 0
      %s184 = smul.addr %s181, 2
      %s185 = sadd.s32 %s183, %s184
      %s186 = smul.addr %s185, 8
      %s187 = scalar_lea.vmem %s0, %s186
      %p188 = pneg %p49
      %p189 = pneg %p46
      %p190 = scmp.lt.s32.totalorder %s18, 0
      %s191 = scalar_select %p190, %s18, 0
      %s192 = smul.addr %s191, 8
      %s193 = scalar_lea.vmem %s1, %s192
      %p194 = pneg %p75
      %p195 = pneg %p72
      %p196 = scmp.lt.s32.totalorder %s18, 0
      %s197 = scalar_select %p196, %s18, 0
      %s198 = scalar_lea.vmem %s2, %s197
      %p199 = pneg %p101
      %p200 = pneg %p98
      %p201 = pneg %p127
      %p202 = pneg %p124
      %p203 = scmp.lt.s32.totalorder %s18, 0
      %s204 = scalar_select %p203, %s18, 0
      %s205 = scalar_lea.vmem %s3, %s204
      %s206 = smul.u32 8, %s19
      %p207 = scmp.lt.s32.totalorder %s206, 15
      %s208 = scalar_select %p207, %s206, 15
      %p209 = scmp.lt.s32.totalorder %s18, 0
      %s210 = scalar_select %p209, %s18, 0
      %s211 = smul.addr %s208, 2
      %s212 = sadd.s32 %s210, %s211
      %s213 = smul.addr %s212, 8
      %s214 = scalar_lea.vmem %s0, %s213
      %s215 = smul.u32 8, %s19
      %p216 = scmp.lt.s32.totalorder %s18, 0
      %s217 = scalar_select %p216, %s18, 0
      %s218 = smul.addr %s217, 8
      %s219 = scalar_lea.vmem %s1, %s218
      %p220 = scmp.lt.s32.totalorder %s18, 0
      %s221 = scalar_select %p220, %s18, 0
      %s222 = scalar_lea.vmem %s2, %s221
      %p223 = scmp.lt.s32.totalorder %s18, 0
      %s224 = scalar_select %p223, %s18, 0
      %s225 = scalar_lea.vmem %s3, %s224
      %v226 = vld [vmem:[%s214] sm:$0xff]
      %v227 = vld [vmem:[%s214 + $0x8] sm:$0x7]
      %v228 = vld [vmem:[%s214 + $0x10] sm:$0xff]
      %v229 = vld [vmem:[%s214 + $0x18] sm:$0x7]
      %v230 = vld [vmem:[%s214 + $0x20] sm:$0xff]
      %v231 = vld [vmem:[%s214 + $0x28] sm:$0x7]
      %v232 = vld [vmem:[%s214 + $0x30] sm:$0xff]
      %v233 = vld [vmem:[%s214 + $0x38] sm:$0x7]
      %v234 = vld [vmem:[%s214 + $0x40] sm:$0xff]
      %v235 = vld [vmem:[%s214 + $0x48] sm:$0x7]
      %v236 = vld [vmem:[%s214 + $0x50] sm:$0xff]
      %v237 = vld [vmem:[%s214 + $0x58] sm:$0x7]
      %v238 = vld [vmem:[%s214 + $0x60] sm:$0xff]
      %v239 = vld [vmem:[%s214 + $0x68] sm:$0x7]
      %v240 = vld [vmem:[%s214 + $0x70] sm:$0xff]
      %v241 = vld [vmem:[%s214 + $0x78] sm:$0x7]
      %v242 = vld [vmem:[%s219] sm:$0xff]
      %v243 = vld [vmem:[%s219 + $0x8] sm:$0xff]
      %v244 = vld [vmem:[%s222] sm:$0x1]
      %v245 = vlaneseq
      %v246 = vshrl.u32 %v245, 7
      %v247 = vadd.s32 %v246, 8
      %v248 = vmul.u32 %v244, 2
      %v249 = vadd.s32 %v248, 1
      %v250 = vlaneseq
      %v251 = vshrl.u32 %v250, 7
      %v252 = vsub.s32 0, %v251
      %v253 = vrot.slane %v249, %v252
      %vm254 = vcmp.lt.s32.totalorder %v246, %v253
      %vm255 = vcmp.lt.s32.totalorder %v247, %v253
      %vm256 = vcmask 1041408
      %v257 = vrot.slane %v242, 6
      %v258 = vrot.slane %v243, 6
      %v259 = vsel %vm256, %v257, %v258
      %v260 = vsel %vm256, %v242, %v257
      %vm261 = vcmp.ge.s32.totalorder %v246, 2
      %vm262 = vcmp.ge.s32.totalorder %v247, 2
      %vm263 = vcmp.ne.s32.totalorder %v242, 0
      %vm264 = vcmp.ne.s32.totalorder %v243, 0
      %vm265 = vcmp.ne.s32.totalorder %v242, %v260
      %vm266 = vcmp.ne.s32.totalorder %v243, %v259
      %vm267 = vmand %vm263, %vm265
      %vm268 = vmand %vm264, %vm266
      %vm269 = vmand %vm261, %vm267
      %vm270 = vmand %vm262, %vm268
      %vm271 = vcmp.eq.s32.totalorder %v242, 0
      %vm272 = vcmp.eq.s32.totalorder %v243, 0
      %vm273 = vcmp.eq.s32.totalorder %v242, 1
      %vm274 = vcmp.eq.s32.totalorder %v243, 1
      %vm275 = vcmp.eq.s32.totalorder %v242, 2
      %vm276 = vcmp.eq.s32.totalorder %v243, 2
      %vm277 = vcmp.eq.s32.totalorder %v242, 3
      %vm278 = vcmp.eq.s32.totalorder %v243, 3
      %vm279 = vcmp.eq.s32.totalorder %v242, 4
      %vm280 = vcmp.eq.s32.totalorder %v243, 4
      %vm281 = vcmp.eq.s32.totalorder %v242, 5
      %vm282 = vcmp.eq.s32.totalorder %v243, 5
      %vm283 = vcmp.eq.s32.totalorder %v242, 6
      %vm284 = vcmp.eq.s32.totalorder %v243, 6
      %vm285 = vcmp.eq.s32.totalorder %v242, 7
      %vm286 = vcmp.eq.s32.totalorder %v243, 7
      %vm287 = vcmp.eq.s32.totalorder %v242, 8
      %vm288 = vcmp.eq.s32.totalorder %v243, 8
      %vm289 = vcmp.eq.s32.totalorder %v242, 9
      %vm290 = vcmp.eq.s32.totalorder %v243, 9
      %vm291 = vcmp.eq.s32.totalorder %v242, 10
      %vm292 = vcmp.eq.s32.totalorder %v243, 10
      %v293 = vsel %vm271, 1, 0
      %v294 = vsel %vm272, 1, 0
      %v295 = vsel %vm273, 1, 0
      %v296 = vsel %vm274, 1, 0
      %v297 = vsel %vm275, 1, 0
      %v298 = vsel %vm276, 1, 0
      %v299 = vsel %vm277, 1, 0
      %v300 = vsel %vm278, 1, 0
      %v301 = vsel %vm279, 1, 0
      %v302 = vsel %vm280, 1, 0
      %v303 = vsel %vm281, 1, 0
      %v304 = vsel %vm282, 1, 0
      %v305 = vsel %vm283, 1, 0
      %v306 = vsel %vm284, 1, 0
      %v307 = vsel %vm285, 1, 0
      %v308 = vsel %vm286, 1, 0
      %v309 = vsel %vm287, 1, 0
      %v310 = vsel %vm288, 1, 0
      %v311 = vsel %vm289, 1, 0
      %v312 = vsel %vm290, 1, 0
      %v313 = vsel %vm291, 1, 0
      %v314 = vsel %vm292, 1, 0
      %v315 = vcvt.s32.f32 %v293
      %v316 = vcvt.s32.f32 %v294
      %v317 = vcvt.s32.f32 %v295
      %v318 = vcvt.s32.f32 %v296
      %v319 = vcvt.s32.f32 %v297
      %v320 = vcvt.s32.f32 %v298
      %v321 = vcvt.s32.f32 %v299
      %v322 = vcvt.s32.f32 %v300
      %v323 = vcvt.s32.f32 %v301
      %v324 = vcvt.s32.f32 %v302
      %v325 = vcvt.s32.f32 %v303
      %v326 = vcvt.s32.f32 %v304
      %v327 = vcvt.s32.f32 %v305
      %v328 = vcvt.s32.f32 %v306
      %v329 = vcvt.s32.f32 %v307
      %v330 = vcvt.s32.f32 %v308
      %v331 = vcvt.s32.f32 %v309
      %v332 = vcvt.s32.f32 %v310
      %v333 = vcvt.s32.f32 %v311
      %v334 = vcvt.s32.f32 %v312
      %v335 = vcvt.s32.f32 %v313
      %v336 = vcvt.s32.f32 %v314
      %v353 = vcombine.high %v226, %v226
      %v355 = vunpack.c.l.s4 1966171168
      %v356 = vunpack.c.0.s8 %v355
      %v357 = vlaneseq
      %v358 = vshrl.u32 %v357, 7
      %v359 = vsub.s32 %v356, %v358
      %v360 = vrot.slane %v226, %v359
      %v362 = vunpack.c.l.s4 1966171168
      %v363 = vunpack.c.0.s8 %v362
      %v364 = vlaneseq
      %v365 = vshrl.u32 %v364, 7
      %v366 = vsub.s32 %v363, %v365
      %v367 = vrot.slane %v353, %v366
      %v368 = vcombine.high %v360, %v360
      %v369 = vcombine.high %v367, %v367
      %v371 = vunpack.c.l.s4 1966171168
      %v372 = vunpack.c.0.s8 %v371
      %v373 = vlaneseq
      %v374 = vshrl.u32 %v373, 7
      %v375 = vsub.s32 %v372, %v374
      %v376 = vrot.slane %v360, %v375
      %v378 = vunpack.c.l.s4 1966171168
      %v379 = vunpack.c.0.s8 %v378
      %v380 = vlaneseq
      %v381 = vshrl.u32 %v380, 7
      %v382 = vsub.s32 %v379, %v381
      %v383 = vrot.slane %v367, %v382
      %v385 = vunpack.c.l.s4 1966171168
      %v386 = vunpack.c.0.s8 %v385
      %v387 = vlaneseq
      %v388 = vshrl.u32 %v387, 7
      %v389 = vsub.s32 %v386, %v388
      %v390 = vrot.slane %v368, %v389
      %v392 = vunpack.c.l.s4 1966171168
      %v393 = vunpack.c.0.s8 %v392
      %v394 = vlaneseq
      %v395 = vshrl.u32 %v394, 7
      %v396 = vsub.s32 %v393, %v395
      %v397 = vrot.slane %v369, %v396
      %v398 = vcombine.high %v376, %v376
      %v399 = vcombine.high %v383, %v383
      %v400 = vcombine.high %v390, %v390
      %v401 = vcombine.high %v397, %v397
      %v403 = vunpack.c.l.s4 1966171168
      %v404 = vunpack.c.0.s8 %v403
      %v405 = vlaneseq
      %v406 = vshrl.u32 %v405, 7
      %v407 = vsub.s32 %v404, %v406
      %v408 = vrot.slane %v227, %v407
      %v409 = vcombine.high %v408, %v408
      %v411 = vunpack.c.l.s4 1966171168
      %v412 = vunpack.c.0.s8 %v411
      %v413 = vlaneseq
      %v414 = vshrl.u32 %v413, 7
      %v415 = vsub.s32 %v412, %v414
      %v416 = vrot.slane %v408, %v415
      %v418 = vunpack.c.l.s4 1966171168
      %v419 = vunpack.c.0.s8 %v418
      %v420 = vlaneseq
      %v421 = vshrl.u32 %v420, 7
      %v422 = vsub.s32 %v419, %v421
      %v423 = vrot.slane %v409, %v422
      %v424 = vcombine.high %v416, %v416
      %v425 = vcombine.high %v228, %v228
      %v427 = vunpack.c.l.s4 1966171168
      %v428 = vunpack.c.0.s8 %v427
      %v429 = vlaneseq
      %v430 = vshrl.u32 %v429, 7
      %v431 = vsub.s32 %v428, %v430
      %v432 = vrot.slane %v228, %v431
      %v434 = vunpack.c.l.s4 1966171168
      %v435 = vunpack.c.0.s8 %v434
      %v436 = vlaneseq
      %v437 = vshrl.u32 %v436, 7
      %v438 = vsub.s32 %v435, %v437
      %v439 = vrot.slane %v425, %v438
      %v440 = vcombine.high %v432, %v432
      %v441 = vcombine.high %v439, %v439
      %v443 = vunpack.c.l.s4 1966171168
      %v444 = vunpack.c.0.s8 %v443
      %v445 = vlaneseq
      %v446 = vshrl.u32 %v445, 7
      %v447 = vsub.s32 %v444, %v446
      %v448 = vrot.slane %v432, %v447
      %v450 = vunpack.c.l.s4 1966171168
      %v451 = vunpack.c.0.s8 %v450
      %v452 = vlaneseq
      %v453 = vshrl.u32 %v452, 7
      %v454 = vsub.s32 %v451, %v453
      %v455 = vrot.slane %v439, %v454
      %v457 = vunpack.c.l.s4 1966171168
      %v458 = vunpack.c.0.s8 %v457
      %v459 = vlaneseq
      %v460 = vshrl.u32 %v459, 7
      %v461 = vsub.s32 %v458, %v460
      %v462 = vrot.slane %v440, %v461
      %v464 = vunpack.c.l.s4 1966171168
      %v465 = vunpack.c.0.s8 %v464
      %v466 = vlaneseq
      %v467 = vshrl.u32 %v466, 7
      %v468 = vsub.s32 %v465, %v467
      %v469 = vrot.slane %v441, %v468
      %v470 = vcombine.high %v448, %v448
      %v471 = vcombine.high %v455, %v455
      %v472 = vcombine.high %v462, %v462
      %v473 = vcombine.high %v469, %v469
      %v475 = vunpack.c.l.s4 1966171168
      %v476 = vunpack.c.0.s8 %v475
      %v477 = vlaneseq
      %v478 = vshrl.u32 %v477, 7
      %v479 = vsub.s32 %v476, %v478
      %v480 = vrot.slane %v229, %v479
      %v481 = vcombine.high %v480, %v480
      %v483 = vunpack.c.l.s4 1966171168
      %v484 = vunpack.c.0.s8 %v483
      %v485 = vlaneseq
      %v486 = vshrl.u32 %v485, 7
      %v487 = vsub.s32 %v484, %v486
      %v488 = vrot.slane %v480, %v487
      %v490 = vunpack.c.l.s4 1966171168
      %v491 = vunpack.c.0.s8 %v490
      %v492 = vlaneseq
      %v493 = vshrl.u32 %v492, 7
      %v494 = vsub.s32 %v491, %v493
      %v495 = vrot.slane %v481, %v494
      %v496 = vcombine.high %v488, %v488
      %v497 = vcombine.high %v230, %v230
      %v499 = vunpack.c.l.s4 1966171168
      %v500 = vunpack.c.0.s8 %v499
      %v501 = vlaneseq
      %v502 = vshrl.u32 %v501, 7
      %v503 = vsub.s32 %v500, %v502
      %v504 = vrot.slane %v230, %v503
      %v506 = vunpack.c.l.s4 1966171168
      %v507 = vunpack.c.0.s8 %v506
      %v508 = vlaneseq
      %v509 = vshrl.u32 %v508, 7
      %v510 = vsub.s32 %v507, %v509
      %v511 = vrot.slane %v497, %v510
      %v512 = vcombine.high %v504, %v504
      %v513 = vcombine.high %v511, %v511
      %v515 = vunpack.c.l.s4 1966171168
      %v516 = vunpack.c.0.s8 %v515
      %v517 = vlaneseq
      %v518 = vshrl.u32 %v517, 7
      %v519 = vsub.s32 %v516, %v518
      %v520 = vrot.slane %v504, %v519
      %v522 = vunpack.c.l.s4 1966171168
      %v523 = vunpack.c.0.s8 %v522
      %v524 = vlaneseq
      %v525 = vshrl.u32 %v524, 7
      %v526 = vsub.s32 %v523, %v525
      %v527 = vrot.slane %v511, %v526
      %v529 = vunpack.c.l.s4 1966171168
      %v530 = vunpack.c.0.s8 %v529
      %v531 = vlaneseq
      %v532 = vshrl.u32 %v531, 7
      %v533 = vsub.s32 %v530, %v532
      %v534 = vrot.slane %v512, %v533
      %v536 = vunpack.c.l.s4 1966171168
      %v537 = vunpack.c.0.s8 %v536
      %v538 = vlaneseq
      %v539 = vshrl.u32 %v538, 7
      %v540 = vsub.s32 %v537, %v539
      %v541 = vrot.slane %v513, %v540
      %v542 = vcombine.high %v520, %v520
      %v543 = vcombine.high %v527, %v527
      %v544 = vcombine.high %v534, %v534
      %v545 = vcombine.high %v541, %v541
      %v547 = vunpack.c.l.s4 1966171168
      %v548 = vunpack.c.0.s8 %v547
      %v549 = vlaneseq
      %v550 = vshrl.u32 %v549, 7
      %v551 = vsub.s32 %v548, %v550
      %v552 = vrot.slane %v231, %v551
      %v553 = vcombine.high %v552, %v552
      %v555 = vunpack.c.l.s4 1966171168
      %v556 = vunpack.c.0.s8 %v555
      %v557 = vlaneseq
      %v558 = vshrl.u32 %v557, 7
      %v559 = vsub.s32 %v556, %v558
      %v560 = vrot.slane %v552, %v559
      %v562 = vunpack.c.l.s4 1966171168
      %v563 = vunpack.c.0.s8 %v562
      %v564 = vlaneseq
      %v565 = vshrl.u32 %v564, 7
      %v566 = vsub.s32 %v563, %v565
      %v567 = vrot.slane %v553, %v566
      %v568 = vcombine.high %v560, %v560
      %v569 = vcombine.high %v232, %v232
      %v571 = vunpack.c.l.s4 1966171168
      %v572 = vunpack.c.0.s8 %v571
      %v573 = vlaneseq
      %v574 = vshrl.u32 %v573, 7
      %v575 = vsub.s32 %v572, %v574
      %v576 = vrot.slane %v232, %v575
      %v578 = vunpack.c.l.s4 1966171168
      %v579 = vunpack.c.0.s8 %v578
      %v580 = vlaneseq
      %v581 = vshrl.u32 %v580, 7
      %v582 = vsub.s32 %v579, %v581
      %v583 = vrot.slane %v569, %v582
      %v584 = vcombine.high %v576, %v576
      %v585 = vcombine.high %v583, %v583
      %v587 = vunpack.c.l.s4 1966171168
      %v588 = vunpack.c.0.s8 %v587
      %v589 = vlaneseq
      %v590 = vshrl.u32 %v589, 7
      %v591 = vsub.s32 %v588, %v590
      %v592 = vrot.slane %v576, %v591
      %v594 = vunpack.c.l.s4 1966171168
      %v595 = vunpack.c.0.s8 %v594
      %v596 = vlaneseq
      %v597 = vshrl.u32 %v596, 7
      %v598 = vsub.s32 %v595, %v597
      %v599 = vrot.slane %v583, %v598
      %v601 = vunpack.c.l.s4 1966171168
      %v602 = vunpack.c.0.s8 %v601
      %v603 = vlaneseq
      %v604 = vshrl.u32 %v603, 7
      %v605 = vsub.s32 %v602, %v604
      %v606 = vrot.slane %v584, %v605
      %v608 = vunpack.c.l.s4 1966171168
      %v609 = vunpack.c.0.s8 %v608
      %v610 = vlaneseq
      %v611 = vshrl.u32 %v610, 7
      %v612 = vsub.s32 %v609, %v611
      %v613 = vrot.slane %v585, %v612
      %v614 = vcombine.high %v592, %v592
      %v615 = vcombine.high %v599, %v599
      %v616 = vcombine.high %v606, %v606
      %v617 = vcombine.high %v613, %v613
      %v619 = vunpack.c.l.s4 1966171168
      %v620 = vunpack.c.0.s8 %v619
      %v621 = vlaneseq
      %v622 = vshrl.u32 %v621, 7
      %v623 = vsub.s32 %v620, %v622
      %v624 = vrot.slane %v233, %v623
      %v625 = vcombine.high %v624, %v624
      %v627 = vunpack.c.l.s4 1966171168
      %v628 = vunpack.c.0.s8 %v627
      %v629 = vlaneseq
      %v630 = vshrl.u32 %v629, 7
      %v631 = vsub.s32 %v628, %v630
      %v632 = vrot.slane %v624, %v631
      %v634 = vunpack.c.l.s4 1966171168
      %v635 = vunpack.c.0.s8 %v634
      %v636 = vlaneseq
      %v637 = vshrl.u32 %v636, 7
      %v638 = vsub.s32 %v635, %v637
      %v639 = vrot.slane %v625, %v638
      %v640 = vcombine.high %v632, %v632
      %v641 = vcombine.high %v234, %v234
      %v643 = vunpack.c.l.s4 1966171168
      %v644 = vunpack.c.0.s8 %v643
      %v645 = vlaneseq
      %v646 = vshrl.u32 %v645, 7
      %v647 = vsub.s32 %v644, %v646
      %v648 = vrot.slane %v234, %v647
      %v650 = vunpack.c.l.s4 1966171168
      %v651 = vunpack.c.0.s8 %v650
      %v652 = vlaneseq
      %v653 = vshrl.u32 %v652, 7
      %v654 = vsub.s32 %v651, %v653
      %v655 = vrot.slane %v641, %v654
      %v656 = vcombine.high %v648, %v648
      %v657 = vcombine.high %v655, %v655
      %v659 = vunpack.c.l.s4 1966171168
      %v660 = vunpack.c.0.s8 %v659
      %v661 = vlaneseq
      %v662 = vshrl.u32 %v661, 7
      %v663 = vsub.s32 %v660, %v662
      %v664 = vrot.slane %v648, %v663
      %v666 = vunpack.c.l.s4 1966171168
      %v667 = vunpack.c.0.s8 %v666
      %v668 = vlaneseq
      %v669 = vshrl.u32 %v668, 7
      %v670 = vsub.s32 %v667, %v669
      %v671 = vrot.slane %v655, %v670
      %v673 = vunpack.c.l.s4 1966171168
      %v674 = vunpack.c.0.s8 %v673
      %v675 = vlaneseq
      %v676 = vshrl.u32 %v675, 7
      %v677 = vsub.s32 %v674, %v676
      %v678 = vrot.slane %v656, %v677
      %v680 = vunpack.c.l.s4 1966171168
      %v681 = vunpack.c.0.s8 %v680
      %v682 = vlaneseq
      %v683 = vshrl.u32 %v682, 7
      %v684 = vsub.s32 %v681, %v683
      %v685 = vrot.slane %v657, %v684
      %v686 = vcombine.high %v664, %v664
      %v687 = vcombine.high %v671, %v671
      %v688 = vcombine.high %v678, %v678
      %v689 = vcombine.high %v685, %v685
      %v691 = vunpack.c.l.s4 1966171168
      %v692 = vunpack.c.0.s8 %v691
      %v693 = vlaneseq
      %v694 = vshrl.u32 %v693, 7
      %v695 = vsub.s32 %v692, %v694
      %v696 = vrot.slane %v235, %v695
      %v697 = vcombine.high %v696, %v696
      %v699 = vunpack.c.l.s4 1966171168
      %v700 = vunpack.c.0.s8 %v699
      %v701 = vlaneseq
      %v702 = vshrl.u32 %v701, 7
      %v703 = vsub.s32 %v700, %v702
      %v704 = vrot.slane %v696, %v703
      %v706 = vunpack.c.l.s4 1966171168
      %v707 = vunpack.c.0.s8 %v706
      %v708 = vlaneseq
      %v709 = vshrl.u32 %v708, 7
      %v710 = vsub.s32 %v707, %v709
      %v711 = vrot.slane %v697, %v710
      %v712 = vcombine.high %v704, %v704
      %v713 = vcombine.high %v236, %v236
      %v715 = vunpack.c.l.s4 1966171168
      %v716 = vunpack.c.0.s8 %v715
      %v717 = vlaneseq
      %v718 = vshrl.u32 %v717, 7
      %v719 = vsub.s32 %v716, %v718
      %v720 = vrot.slane %v236, %v719
      %v722 = vunpack.c.l.s4 1966171168
      %v723 = vunpack.c.0.s8 %v722
      %v724 = vlaneseq
      %v725 = vshrl.u32 %v724, 7
      %v726 = vsub.s32 %v723, %v725
      %v727 = vrot.slane %v713, %v726
      %v728 = vcombine.high %v720, %v720
      %v729 = vcombine.high %v727, %v727
      %v731 = vunpack.c.l.s4 1966171168
      %v732 = vunpack.c.0.s8 %v731
      %v733 = vlaneseq
      %v734 = vshrl.u32 %v733, 7
      %v735 = vsub.s32 %v732, %v734
      %v736 = vrot.slane %v720, %v735
      %v738 = vunpack.c.l.s4 1966171168
      %v739 = vunpack.c.0.s8 %v738
      %v740 = vlaneseq
      %v741 = vshrl.u32 %v740, 7
      %v742 = vsub.s32 %v739, %v741
      %v743 = vrot.slane %v727, %v742
      %v745 = vunpack.c.l.s4 1966171168
      %v746 = vunpack.c.0.s8 %v745
      %v747 = vlaneseq
      %v748 = vshrl.u32 %v747, 7
      %v749 = vsub.s32 %v746, %v748
      %v750 = vrot.slane %v728, %v749
      %v752 = vunpack.c.l.s4 1966171168
      %v753 = vunpack.c.0.s8 %v752
      %v754 = vlaneseq
      %v755 = vshrl.u32 %v754, 7
      %v756 = vsub.s32 %v753, %v755
      %v757 = vrot.slane %v729, %v756
      %v758 = vcombine.high %v736, %v736
      %v759 = vcombine.high %v743, %v743
      %v760 = vcombine.high %v750, %v750
      %v761 = vcombine.high %v757, %v757
      %v763 = vunpack.c.l.s4 1966171168
      %v764 = vunpack.c.0.s8 %v763
      %v765 = vlaneseq
      %v766 = vshrl.u32 %v765, 7
      %v767 = vsub.s32 %v764, %v766
      %v768 = vrot.slane %v237, %v767
      %v769 = vcombine.high %v768, %v768
      %v771 = vunpack.c.l.s4 1966171168
      %v772 = vunpack.c.0.s8 %v771
      %v773 = vlaneseq
      %v774 = vshrl.u32 %v773, 7
      %v775 = vsub.s32 %v772, %v774
      %v776 = vrot.slane %v768, %v775
      %v778 = vunpack.c.l.s4 1966171168
      %v779 = vunpack.c.0.s8 %v778
      %v780 = vlaneseq
      %v781 = vshrl.u32 %v780, 7
      %v782 = vsub.s32 %v779, %v781
      %v783 = vrot.slane %v769, %v782
      %v784 = vcombine.high %v776, %v776
      %v785 = vcombine.high %v238, %v238
      %v787 = vunpack.c.l.s4 1966171168
      %v788 = vunpack.c.0.s8 %v787
      %v789 = vlaneseq
      %v790 = vshrl.u32 %v789, 7
      %v791 = vsub.s32 %v788, %v790
      %v792 = vrot.slane %v238, %v791
      %v794 = vunpack.c.l.s4 1966171168
      %v795 = vunpack.c.0.s8 %v794
      %v796 = vlaneseq
      %v797 = vshrl.u32 %v796, 7
      %v798 = vsub.s32 %v795, %v797
      %v799 = vrot.slane %v785, %v798
      %v800 = vcombine.high %v792, %v792
      %v801 = vcombine.high %v799, %v799
      %v803 = vunpack.c.l.s4 1966171168
      %v804 = vunpack.c.0.s8 %v803
      %v805 = vlaneseq
      %v806 = vshrl.u32 %v805, 7
      %v807 = vsub.s32 %v804, %v806
      %v808 = vrot.slane %v792, %v807
      %v810 = vunpack.c.l.s4 1966171168
      %v811 = vunpack.c.0.s8 %v810
      %v812 = vlaneseq
      %v813 = vshrl.u32 %v812, 7
      %v814 = vsub.s32 %v811, %v813
      %v815 = vrot.slane %v799, %v814
      %v817 = vunpack.c.l.s4 1966171168
      %v818 = vunpack.c.0.s8 %v817
      %v819 = vlaneseq
      %v820 = vshrl.u32 %v819, 7
      %v821 = vsub.s32 %v818, %v820
      %v822 = vrot.slane %v800, %v821
      %v824 = vunpack.c.l.s4 1966171168
      %v825 = vunpack.c.0.s8 %v824
      %v826 = vlaneseq
      %v827 = vshrl.u32 %v826, 7
      %v828 = vsub.s32 %v825, %v827
      %v829 = vrot.slane %v801, %v828
      %v830 = vcombine.high %v808, %v808
      %v831 = vcombine.high %v815, %v815
      %v832 = vcombine.high %v822, %v822
      %v833 = vcombine.high %v829, %v829
      %v835 = vunpack.c.l.s4 1966171168
      %v836 = vunpack.c.0.s8 %v835
      %v837 = vlaneseq
      %v838 = vshrl.u32 %v837, 7
      %v839 = vsub.s32 %v836, %v838
      %v840 = vrot.slane %v239, %v839
      %v841 = vcombine.high %v840, %v840
      %v843 = vunpack.c.l.s4 1966171168
      %v844 = vunpack.c.0.s8 %v843
      %v845 = vlaneseq
      %v846 = vshrl.u32 %v845, 7
      %v847 = vsub.s32 %v844, %v846
      %v848 = vrot.slane %v840, %v847
      %v850 = vunpack.c.l.s4 1966171168
      %v851 = vunpack.c.0.s8 %v850
      %v852 = vlaneseq
      %v853 = vshrl.u32 %v852, 7
      %v854 = vsub.s32 %v851, %v853
      %v855 = vrot.slane %v841, %v854
      %v856 = vcombine.high %v848, %v848
      %v857 = vcombine.high %v240, %v240
      %v859 = vunpack.c.l.s4 1966171168
      %v860 = vunpack.c.0.s8 %v859
      %v861 = vlaneseq
      %v862 = vshrl.u32 %v861, 7
      %v863 = vsub.s32 %v860, %v862
      %v864 = vrot.slane %v240, %v863
      %v866 = vunpack.c.l.s4 1966171168
      %v867 = vunpack.c.0.s8 %v866
      %v868 = vlaneseq
      %v869 = vshrl.u32 %v868, 7
      %v870 = vsub.s32 %v867, %v869
      %v871 = vrot.slane %v857, %v870
      %v872 = vcombine.high %v864, %v864
      %v873 = vcombine.high %v871, %v871
      %v875 = vunpack.c.l.s4 1966171168
      %v876 = vunpack.c.0.s8 %v875
      %v877 = vlaneseq
      %v878 = vshrl.u32 %v877, 7
      %v879 = vsub.s32 %v876, %v878
      %v880 = vrot.slane %v864, %v879
      %v882 = vunpack.c.l.s4 1966171168
      %v883 = vunpack.c.0.s8 %v882
      %v884 = vlaneseq
      %v885 = vshrl.u32 %v884, 7
      %v886 = vsub.s32 %v883, %v885
      %v887 = vrot.slane %v871, %v886
      %v889 = vunpack.c.l.s4 1966171168
      %v890 = vunpack.c.0.s8 %v889
      %v891 = vlaneseq
      %v892 = vshrl.u32 %v891, 7
      %v893 = vsub.s32 %v890, %v892
      %v894 = vrot.slane %v872, %v893
      %v896 = vunpack.c.l.s4 1966171168
      %v897 = vunpack.c.0.s8 %v896
      %v898 = vlaneseq
      %v899 = vshrl.u32 %v898, 7
      %v900 = vsub.s32 %v897, %v899
      %v901 = vrot.slane %v873, %v900
      %v902 = vcombine.high %v880, %v880
      %v903 = vcombine.high %v887, %v887
      %v904 = vcombine.high %v894, %v894
      %v905 = vcombine.high %v901, %v901
      %v907 = vunpack.c.l.s4 1966171168
      %v908 = vunpack.c.0.s8 %v907
      %v909 = vlaneseq
      %v910 = vshrl.u32 %v909, 7
      %v911 = vsub.s32 %v908, %v910
      %v912 = vrot.slane %v241, %v911
      %v913 = vcombine.high %v912, %v912
      %v915 = vunpack.c.l.s4 1966171168
      %v916 = vunpack.c.0.s8 %v915
      %v917 = vlaneseq
      %v918 = vshrl.u32 %v917, 7
      %v919 = vsub.s32 %v916, %v918
      %v920 = vrot.slane %v912, %v919
      %v922 = vunpack.c.l.s4 1966171168
      %v923 = vunpack.c.0.s8 %v922
      %v924 = vlaneseq
      %v925 = vshrl.u32 %v924, 7
      %v926 = vsub.s32 %v923, %v925
      %v927 = vrot.slane %v913, %v926
      %v928 = vcombine.high %v920, %v920
      %v929 = vlaneseq
      %v930 = vshrl.u32 %v929, 7
      %v931 = vsub.s32 0, %v930
      %v932 = vrot.slane %v376, %v931
      %v933 = vlaneseq
      %v934 = vshrl.u32 %v933, 7
      %v935 = vsub.s32 0, %v934
      %v936 = vrot.slane %v390, %v935
      %v937 = vlaneseq
      %v938 = vshrl.u32 %v937, 7
      %v939 = vsub.s32 0, %v938
      %v940 = vrot.slane %v398, %v939
      %v941 = vlaneseq
      %v942 = vshrl.u32 %v941, 7
      %v943 = vsub.s32 0, %v942
      %v944 = vrot.slane %v400, %v943
      %v945 = vlaneseq
      %v946 = vshrl.u32 %v945, 7
      %v947 = vsub.s32 0, %v946
      %v948 = vrot.slane %v383, %v947
      %v949 = vlaneseq
      %v950 = vshrl.u32 %v949, 7
      %v951 = vsub.s32 0, %v950
      %v952 = vrot.slane %v397, %v951
      %v953 = vlaneseq
      %v954 = vshrl.u32 %v953, 7
      %v955 = vsub.s32 0, %v954
      %v956 = vrot.slane %v399, %v955
      %v957 = vlaneseq
      %v958 = vshrl.u32 %v957, 7
      %v959 = vsub.s32 0, %v958
      %v960 = vrot.slane %v401, %v959
      %v961 = vlaneseq
      %v962 = vshrl.u32 %v961, 7
      %v963 = vsub.s32 0, %v962
      %v964 = vrot.slane %v416, %v963
      %v965 = vlaneseq
      %v966 = vshrl.u32 %v965, 7
      %v967 = vsub.s32 0, %v966
      %v968 = vrot.slane %v423, %v967
      %v969 = vlaneseq
      %v970 = vshrl.u32 %v969, 7
      %v971 = vsub.s32 0, %v970
      %v972 = vrot.slane %v424, %v971
      %v973 = vlaneseq
      %v974 = vshrl.u32 %v973, 7
      %v975 = vsub.s32 0, %v974
      %v976 = vrot.slane %v448, %v975
      %v977 = vlaneseq
      %v978 = vshrl.u32 %v977, 7
      %v979 = vsub.s32 0, %v978
      %v980 = vrot.slane %v462, %v979
      %v981 = vlaneseq
      %v982 = vshrl.u32 %v981, 7
      %v983 = vsub.s32 0, %v982
      %v984 = vrot.slane %v470, %v983
      %v985 = vlaneseq
      %v986 = vshrl.u32 %v985, 7
      %v987 = vsub.s32 0, %v986
      %v988 = vrot.slane %v472, %v987
      %v989 = vlaneseq
      %v990 = vshrl.u32 %v989, 7
      %v991 = vsub.s32 0, %v990
      %v992 = vrot.slane %v455, %v991
      %v993 = vlaneseq
      %v994 = vshrl.u32 %v993, 7
      %v995 = vsub.s32 0, %v994
      %v996 = vrot.slane %v469, %v995
      %v997 = vlaneseq
      %v998 = vshrl.u32 %v997, 7
      %v999 = vsub.s32 0, %v998
      %v1000 = vrot.slane %v471, %v999
      %v1001 = vlaneseq
      %v1002 = vshrl.u32 %v1001, 7
      %v1003 = vsub.s32 0, %v1002
      %v1004 = vrot.slane %v473, %v1003
      %v1005 = vlaneseq
      %v1006 = vshrl.u32 %v1005, 7
      %v1007 = vsub.s32 0, %v1006
      %v1008 = vrot.slane %v488, %v1007
      %v1009 = vlaneseq
      %v1010 = vshrl.u32 %v1009, 7
      %v1011 = vsub.s32 0, %v1010
      %v1012 = vrot.slane %v495, %v1011
      %v1013 = vlaneseq
      %v1014 = vshrl.u32 %v1013, 7
      %v1015 = vsub.s32 0, %v1014
      %v1016 = vrot.slane %v496, %v1015
      %v1017 = vlaneseq
      %v1018 = vshrl.u32 %v1017, 7
      %v1019 = vsub.s32 0, %v1018
      %v1020 = vrot.slane %v520, %v1019
      %v1021 = vlaneseq
      %v1022 = vshrl.u32 %v1021, 7
      %v1023 = vsub.s32 0, %v1022
      %v1024 = vrot.slane %v534, %v1023
      %v1025 = vlaneseq
      %v1026 = vshrl.u32 %v1025, 7
      %v1027 = vsub.s32 0, %v1026
      %v1028 = vrot.slane %v542, %v1027
      %v1029 = vlaneseq
      %v1030 = vshrl.u32 %v1029, 7
      %v1031 = vsub.s32 0, %v1030
      %v1032 = vrot.slane %v544, %v1031
      %v1033 = vlaneseq
      %v1034 = vshrl.u32 %v1033, 7
      %v1035 = vsub.s32 0, %v1034
      %v1036 = vrot.slane %v527, %v1035
      %v1037 = vlaneseq
      %v1038 = vshrl.u32 %v1037, 7
      %v1039 = vsub.s32 0, %v1038
      %v1040 = vrot.slane %v541, %v1039
      %v1041 = vlaneseq
      %v1042 = vshrl.u32 %v1041, 7
      %v1043 = vsub.s32 0, %v1042
      %v1044 = vrot.slane %v543, %v1043
      %v1045 = vlaneseq
      %v1046 = vshrl.u32 %v1045, 7
      %v1047 = vsub.s32 0, %v1046
      %v1048 = vrot.slane %v545, %v1047
      %v1049 = vlaneseq
      %v1050 = vshrl.u32 %v1049, 7
      %v1051 = vsub.s32 0, %v1050
      %v1052 = vrot.slane %v560, %v1051
      %v1053 = vlaneseq
      %v1054 = vshrl.u32 %v1053, 7
      %v1055 = vsub.s32 0, %v1054
      %v1056 = vrot.slane %v567, %v1055
      %v1057 = vlaneseq
      %v1058 = vshrl.u32 %v1057, 7
      %v1059 = vsub.s32 0, %v1058
      %v1060 = vrot.slane %v568, %v1059
      %v1061 = vlaneseq
      %v1062 = vshrl.u32 %v1061, 7
      %v1063 = vsub.s32 0, %v1062
      %v1064 = vrot.slane %v592, %v1063
      %v1065 = vlaneseq
      %v1066 = vshrl.u32 %v1065, 7
      %v1067 = vsub.s32 0, %v1066
      %v1068 = vrot.slane %v606, %v1067
      %v1069 = vlaneseq
      %v1070 = vshrl.u32 %v1069, 7
      %v1071 = vsub.s32 0, %v1070
      %v1072 = vrot.slane %v614, %v1071
      %v1073 = vlaneseq
      %v1074 = vshrl.u32 %v1073, 7
      %v1075 = vsub.s32 0, %v1074
      %v1076 = vrot.slane %v616, %v1075
      %v1077 = vlaneseq
      %v1078 = vshrl.u32 %v1077, 7
      %v1079 = vsub.s32 0, %v1078
      %v1080 = vrot.slane %v599, %v1079
      %v1081 = vlaneseq
      %v1082 = vshrl.u32 %v1081, 7
      %v1083 = vsub.s32 0, %v1082
      %v1084 = vrot.slane %v613, %v1083
      %v1085 = vlaneseq
      %v1086 = vshrl.u32 %v1085, 7
      %v1087 = vsub.s32 0, %v1086
      %v1088 = vrot.slane %v615, %v1087
      %v1089 = vlaneseq
      %v1090 = vshrl.u32 %v1089, 7
      %v1091 = vsub.s32 0, %v1090
      %v1092 = vrot.slane %v617, %v1091
      %v1093 = vlaneseq
      %v1094 = vshrl.u32 %v1093, 7
      %v1095 = vsub.s32 0, %v1094
      %v1096 = vrot.slane %v632, %v1095
      %v1097 = vlaneseq
      %v1098 = vshrl.u32 %v1097, 7
      %v1099 = vsub.s32 0, %v1098
      %v1100 = vrot.slane %v639, %v1099
      %v1101 = vlaneseq
      %v1102 = vshrl.u32 %v1101, 7
      %v1103 = vsub.s32 0, %v1102
      %v1104 = vrot.slane %v640, %v1103
      %v1105 = vlaneseq
      %v1106 = vshrl.u32 %v1105, 7
      %v1107 = vsub.s32 0, %v1106
      %v1108 = vrot.slane %v664, %v1107
      %v1109 = vlaneseq
      %v1110 = vshrl.u32 %v1109, 7
      %v1111 = vsub.s32 0, %v1110
      %v1112 = vrot.slane %v678, %v1111
      %v1113 = vlaneseq
      %v1114 = vshrl.u32 %v1113, 7
      %v1115 = vsub.s32 0, %v1114
      %v1116 = vrot.slane %v686, %v1115
      %v1117 = vlaneseq
      %v1118 = vshrl.u32 %v1117, 7
      %v1119 = vsub.s32 0, %v1118
      %v1120 = vrot.slane %v688, %v1119
      %v1121 = vlaneseq
      %v1122 = vshrl.u32 %v1121, 7
      %v1123 = vsub.s32 0, %v1122
      %v1124 = vrot.slane %v671, %v1123
      %v1125 = vlaneseq
      %v1126 = vshrl.u32 %v1125, 7
      %v1127 = vsub.s32 0, %v1126
      %v1128 = vrot.slane %v685, %v1127
      %v1129 = vlaneseq
      %v1130 = vshrl.u32 %v1129, 7
      %v1131 = vsub.s32 0, %v1130
      %v1132 = vrot.slane %v687, %v1131
      %v1133 = vlaneseq
      %v1134 = vshrl.u32 %v1133, 7
      %v1135 = vsub.s32 0, %v1134
      %v1136 = vrot.slane %v689, %v1135
      %v1137 = vlaneseq
      %v1138 = vshrl.u32 %v1137, 7
      %v1139 = vsub.s32 0, %v1138
      %v1140 = vrot.slane %v704, %v1139
      %v1141 = vlaneseq
      %v1142 = vshrl.u32 %v1141, 7
      %v1143 = vsub.s32 0, %v1142
      %v1144 = vrot.slane %v711, %v1143
      %v1145 = vlaneseq
      %v1146 = vshrl.u32 %v1145, 7
      %v1147 = vsub.s32 0, %v1146
      %v1148 = vrot.slane %v712, %v1147
      %v1149 = vlaneseq
      %v1150 = vshrl.u32 %v1149, 7
      %v1151 = vsub.s32 0, %v1150
      %v1152 = vrot.slane %v736, %v1151
      %v1153 = vlaneseq
      %v1154 = vshrl.u32 %v1153, 7
      %v1155 = vsub.s32 0, %v1154
      %v1156 = vrot.slane %v750, %v1155
      %v1157 = vlaneseq
      %v1158 = vshrl.u32 %v1157, 7
      %v1159 = vsub.s32 0, %v1158
      %v1160 = vrot.slane %v758, %v1159
      %v1161 = vlaneseq
      %v1162 = vshrl.u32 %v1161, 7
      %v1163 = vsub.s32 0, %v1162
      %v1164 = vrot.slane %v760, %v1163
      %v1165 = vlaneseq
      %v1166 = vshrl.u32 %v1165, 7
      %v1167 = vsub.s32 0, %v1166
      %v1168 = vrot.slane %v743, %v1167
      %v1169 = vlaneseq
      %v1170 = vshrl.u32 %v1169, 7
      %v1171 = vsub.s32 0, %v1170
      %v1172 = vrot.slane %v757, %v1171
      %v1173 = vlaneseq
      %v1174 = vshrl.u32 %v1173, 7
      %v1175 = vsub.s32 0, %v1174
      %v1176 = vrot.slane %v759, %v1175
      %v1177 = vlaneseq
      %v1178 = vshrl.u32 %v1177, 7
      %v1179 = vsub.s32 0, %v1178
      %v1180 = vrot.slane %v761, %v1179
      %v1181 = vlaneseq
      %v1182 = vshrl.u32 %v1181, 7
      %v1183 = vsub.s32 0, %v1182
      %v1184 = vrot.slane %v776, %v1183
      %v1185 = vlaneseq
      %v1186 = vshrl.u32 %v1185, 7
      %v1187 = vsub.s32 0, %v1186
      %v1188 = vrot.slane %v783, %v1187
      %v1189 = vlaneseq
      %v1190 = vshrl.u32 %v1189, 7
      %v1191 = vsub.s32 0, %v1190
      %v1192 = vrot.slane %v784, %v1191
      %v1193 = vlaneseq
      %v1194 = vshrl.u32 %v1193, 7
      %v1195 = vsub.s32 0, %v1194
      %v1196 = vrot.slane %v808, %v1195
      %v1197 = vlaneseq
      %v1198 = vshrl.u32 %v1197, 7
      %v1199 = vsub.s32 0, %v1198
      %v1200 = vrot.slane %v822, %v1199
      %v1201 = vlaneseq
      %v1202 = vshrl.u32 %v1201, 7
      %v1203 = vsub.s32 0, %v1202
      %v1204 = vrot.slane %v830, %v1203
      %v1205 = vlaneseq
      %v1206 = vshrl.u32 %v1205, 7
      %v1207 = vsub.s32 0, %v1206
      %v1208 = vrot.slane %v832, %v1207
      %v1209 = vlaneseq
      %v1210 = vshrl.u32 %v1209, 7
      %v1211 = vsub.s32 0, %v1210
      %v1212 = vrot.slane %v815, %v1211
      %v1213 = vlaneseq
      %v1214 = vshrl.u32 %v1213, 7
      %v1215 = vsub.s32 0, %v1214
      %v1216 = vrot.slane %v829, %v1215
      %v1217 = vlaneseq
      %v1218 = vshrl.u32 %v1217, 7
      %v1219 = vsub.s32 0, %v1218
      %v1220 = vrot.slane %v831, %v1219
      %v1221 = vlaneseq
      %v1222 = vshrl.u32 %v1221, 7
      %v1223 = vsub.s32 0, %v1222
      %v1224 = vrot.slane %v833, %v1223
      %v1225 = vlaneseq
      %v1226 = vshrl.u32 %v1225, 7
      %v1227 = vsub.s32 0, %v1226
      %v1228 = vrot.slane %v848, %v1227
      %v1229 = vlaneseq
      %v1230 = vshrl.u32 %v1229, 7
      %v1231 = vsub.s32 0, %v1230
      %v1232 = vrot.slane %v855, %v1231
      %v1233 = vlaneseq
      %v1234 = vshrl.u32 %v1233, 7
      %v1235 = vsub.s32 0, %v1234
      %v1236 = vrot.slane %v856, %v1235
      %v1237 = vlaneseq
      %v1238 = vshrl.u32 %v1237, 7
      %v1239 = vsub.s32 0, %v1238
      %v1240 = vrot.slane %v880, %v1239
      %v1241 = vlaneseq
      %v1242 = vshrl.u32 %v1241, 7
      %v1243 = vsub.s32 0, %v1242
      %v1244 = vrot.slane %v894, %v1243
      %v1245 = vlaneseq
      %v1246 = vshrl.u32 %v1245, 7
      %v1247 = vsub.s32 0, %v1246
      %v1248 = vrot.slane %v902, %v1247
      %v1249 = vlaneseq
      %v1250 = vshrl.u32 %v1249, 7
      %v1251 = vsub.s32 0, %v1250
      %v1252 = vrot.slane %v904, %v1251
      %v1253 = vlaneseq
      %v1254 = vshrl.u32 %v1253, 7
      %v1255 = vsub.s32 0, %v1254
      %v1256 = vrot.slane %v887, %v1255
      %v1257 = vlaneseq
      %v1258 = vshrl.u32 %v1257, 7
      %v1259 = vsub.s32 0, %v1258
      %v1260 = vrot.slane %v901, %v1259
      %v1261 = vlaneseq
      %v1262 = vshrl.u32 %v1261, 7
      %v1263 = vsub.s32 0, %v1262
      %v1264 = vrot.slane %v903, %v1263
      %v1265 = vlaneseq
      %v1266 = vshrl.u32 %v1265, 7
      %v1267 = vsub.s32 0, %v1266
      %v1268 = vrot.slane %v905, %v1267
      %v1269 = vlaneseq
      %v1270 = vshrl.u32 %v1269, 7
      %v1271 = vsub.s32 0, %v1270
      %v1272 = vrot.slane %v920, %v1271
      %v1273 = vlaneseq
      %v1274 = vshrl.u32 %v1273, 7
      %v1275 = vsub.s32 0, %v1274
      %v1276 = vrot.slane %v927, %v1275
      %v1277 = vlaneseq
      %v1278 = vshrl.u32 %v1277, 7
      %v1279 = vsub.s32 0, %v1278
      %v1280 = vrot.slane %v928, %v1279
      %v1369 = vmul.f32 %v932, %v315
      %v1370 = vmul.f32 %v932, %v316
      %v1371 = vmul.f32 %v936, %v317
      %v1372 = vmul.f32 %v936, %v318
      %v1373 = vmul.f32 %v940, %v319
      %v1374 = vmul.f32 %v940, %v320
      %v1375 = vmul.f32 %v944, %v321
      %v1376 = vmul.f32 %v944, %v322
      %v1377 = vmul.f32 %v948, %v323
      %v1378 = vmul.f32 %v948, %v324
      %v1379 = vmul.f32 %v952, %v325
      %v1380 = vmul.f32 %v952, %v326
      %v1381 = vmul.f32 %v956, %v327
      %v1382 = vmul.f32 %v956, %v328
      %v1383 = vmul.f32 %v960, %v329
      %v1384 = vmul.f32 %v960, %v330
      %v1385 = vmul.f32 %v964, %v331
      %v1386 = vmul.f32 %v964, %v332
      %v1387 = vmul.f32 %v968, %v333
      %v1388 = vmul.f32 %v968, %v334
      %v1389 = vmul.f32 %v972, %v335
      %v1390 = vmul.f32 %v972, %v336
      %v1391 = vmul.f32 %v976, %v315
      %v1392 = vmul.f32 %v976, %v316
      %v1393 = vmul.f32 %v980, %v317
      %v1394 = vmul.f32 %v980, %v318
      %v1395 = vmul.f32 %v984, %v319
      %v1396 = vmul.f32 %v984, %v320
      %v1397 = vmul.f32 %v988, %v321
      %v1398 = vmul.f32 %v988, %v322
      %v1399 = vmul.f32 %v992, %v323
      %v1400 = vmul.f32 %v992, %v324
      %v1401 = vmul.f32 %v996, %v325
      %v1402 = vmul.f32 %v996, %v326
      %v1403 = vmul.f32 %v1000, %v327
      %v1404 = vmul.f32 %v1000, %v328
      %v1405 = vmul.f32 %v1004, %v329
      %v1406 = vmul.f32 %v1004, %v330
      %v1407 = vmul.f32 %v1008, %v331
      %v1408 = vmul.f32 %v1008, %v332
      %v1409 = vmul.f32 %v1012, %v333
      %v1410 = vmul.f32 %v1012, %v334
      %v1411 = vmul.f32 %v1016, %v335
      %v1412 = vmul.f32 %v1016, %v336
      %v1413 = vmul.f32 %v1020, %v315
      %v1414 = vmul.f32 %v1020, %v316
      %v1415 = vmul.f32 %v1024, %v317
      %v1416 = vmul.f32 %v1024, %v318
      %v1417 = vmul.f32 %v1028, %v319
      %v1418 = vmul.f32 %v1028, %v320
      %v1419 = vmul.f32 %v1032, %v321
      %v1420 = vmul.f32 %v1032, %v322
      %v1421 = vmul.f32 %v1036, %v323
      %v1422 = vmul.f32 %v1036, %v324
      %v1423 = vmul.f32 %v1040, %v325
      %v1424 = vmul.f32 %v1040, %v326
      %v1425 = vmul.f32 %v1044, %v327
      %v1426 = vmul.f32 %v1044, %v328
      %v1427 = vmul.f32 %v1048, %v329
      %v1428 = vmul.f32 %v1048, %v330
      %v1429 = vmul.f32 %v1052, %v331
      %v1430 = vmul.f32 %v1052, %v332
      %v1431 = vmul.f32 %v1056, %v333
      %v1432 = vmul.f32 %v1056, %v334
      %v1433 = vmul.f32 %v1060, %v335
      %v1434 = vmul.f32 %v1060, %v336
      %v1435 = vmul.f32 %v1064, %v315
      %v1436 = vmul.f32 %v1064, %v316
      %v1437 = vmul.f32 %v1068, %v317
      %v1438 = vmul.f32 %v1068, %v318
      %v1439 = vmul.f32 %v1072, %v319
      %v1440 = vmul.f32 %v1072, %v320
      %v1441 = vmul.f32 %v1076, %v321
      %v1442 = vmul.f32 %v1076, %v322
      %v1443 = vmul.f32 %v1080, %v323
      %v1444 = vmul.f32 %v1080, %v324
      %v1445 = vmul.f32 %v1084, %v325
      %v1446 = vmul.f32 %v1084, %v326
      %v1447 = vmul.f32 %v1088, %v327
      %v1448 = vmul.f32 %v1088, %v328
      %v1449 = vmul.f32 %v1092, %v329
      %v1450 = vmul.f32 %v1092, %v330
      %v1451 = vmul.f32 %v1096, %v331
      %v1452 = vmul.f32 %v1096, %v332
      %v1453 = vmul.f32 %v1100, %v333
      %v1454 = vmul.f32 %v1100, %v334
      %v1455 = vmul.f32 %v1104, %v335
      %v1456 = vmul.f32 %v1104, %v336
      %v1457 = vmul.f32 %v1108, %v315
      %v1458 = vmul.f32 %v1108, %v316
      %v1459 = vmul.f32 %v1112, %v317
      %v1460 = vmul.f32 %v1112, %v318
      %v1461 = vmul.f32 %v1116, %v319
      %v1462 = vmul.f32 %v1116, %v320
      %v1463 = vmul.f32 %v1120, %v321
      %v1464 = vmul.f32 %v1120, %v322
      %v1465 = vmul.f32 %v1124, %v323
      %v1466 = vmul.f32 %v1124, %v324
      %v1467 = vmul.f32 %v1128, %v325
      %v1468 = vmul.f32 %v1128, %v326
      %v1469 = vmul.f32 %v1132, %v327
      %v1470 = vmul.f32 %v1132, %v328
      %v1471 = vmul.f32 %v1136, %v329
      %v1472 = vmul.f32 %v1136, %v330
      %v1473 = vmul.f32 %v1140, %v331
      %v1474 = vmul.f32 %v1140, %v332
      %v1475 = vmul.f32 %v1144, %v333
      %v1476 = vmul.f32 %v1144, %v334
      %v1477 = vmul.f32 %v1148, %v335
      %v1478 = vmul.f32 %v1148, %v336
      %v1479 = vmul.f32 %v1152, %v315
      %v1480 = vmul.f32 %v1152, %v316
      %v1481 = vmul.f32 %v1156, %v317
      %v1482 = vmul.f32 %v1156, %v318
      %v1483 = vmul.f32 %v1160, %v319
      %v1484 = vmul.f32 %v1160, %v320
      %v1485 = vmul.f32 %v1164, %v321
      %v1486 = vmul.f32 %v1164, %v322
      %v1487 = vmul.f32 %v1168, %v323
      %v1488 = vmul.f32 %v1168, %v324
      %v1489 = vmul.f32 %v1172, %v325
      %v1490 = vmul.f32 %v1172, %v326
      %v1491 = vmul.f32 %v1176, %v327
      %v1492 = vmul.f32 %v1176, %v328
      %v1493 = vmul.f32 %v1180, %v329
      %v1494 = vmul.f32 %v1180, %v330
      %v1495 = vmul.f32 %v1184, %v331
      %v1496 = vmul.f32 %v1184, %v332
      %v1497 = vmul.f32 %v1188, %v333
      %v1498 = vmul.f32 %v1188, %v334
      %v1499 = vmul.f32 %v1192, %v335
      %v1500 = vmul.f32 %v1192, %v336
      %v1501 = vmul.f32 %v1196, %v315
      %v1502 = vmul.f32 %v1196, %v316
      %v1503 = vmul.f32 %v1200, %v317
      %v1504 = vmul.f32 %v1200, %v318
      %v1505 = vmul.f32 %v1204, %v319
      %v1506 = vmul.f32 %v1204, %v320
      %v1507 = vmul.f32 %v1208, %v321
      %v1508 = vmul.f32 %v1208, %v322
      %v1509 = vmul.f32 %v1212, %v323
      %v1510 = vmul.f32 %v1212, %v324
      %v1511 = vmul.f32 %v1216, %v325
      %v1512 = vmul.f32 %v1216, %v326
      %v1513 = vmul.f32 %v1220, %v327
      %v1514 = vmul.f32 %v1220, %v328
      %v1515 = vmul.f32 %v1224, %v329
      %v1516 = vmul.f32 %v1224, %v330
      %v1517 = vmul.f32 %v1228, %v331
      %v1518 = vmul.f32 %v1228, %v332
      %v1519 = vmul.f32 %v1232, %v333
      %v1520 = vmul.f32 %v1232, %v334
      %v1521 = vmul.f32 %v1236, %v335
      %v1522 = vmul.f32 %v1236, %v336
      %v1523 = vmul.f32 %v1240, %v315
      %v1524 = vmul.f32 %v1240, %v316
      %v1525 = vmul.f32 %v1244, %v317
      %v1526 = vmul.f32 %v1244, %v318
      %v1527 = vmul.f32 %v1248, %v319
      %v1528 = vmul.f32 %v1248, %v320
      %v1529 = vmul.f32 %v1252, %v321
      %v1530 = vmul.f32 %v1252, %v322
      %v1531 = vmul.f32 %v1256, %v323
      %v1532 = vmul.f32 %v1256, %v324
      %v1533 = vmul.f32 %v1260, %v325
      %v1534 = vmul.f32 %v1260, %v326
      %v1535 = vmul.f32 %v1264, %v327
      %v1536 = vmul.f32 %v1264, %v328
      %v1537 = vmul.f32 %v1268, %v329
      %v1538 = vmul.f32 %v1268, %v330
      %v1539 = vmul.f32 %v1272, %v331
      %v1540 = vmul.f32 %v1272, %v332
      %v1541 = vmul.f32 %v1276, %v333
      %v1542 = vmul.f32 %v1276, %v334
      %v1543 = vmul.f32 %v1280, %v335
      %v1544 = vmul.f32 %v1280, %v336
      %vm1545 = vcmask 31744
      %v1546 = vsel %vm1545, %v1369, 0.0
      %v1547 = vsel %vm1545, %v1371, 0.0
      %v1548 = vadd.f32 %v1546, %v1547
      %v1549 = vsel %vm1545, %v1373, 0.0
      %v1550 = vadd.f32 %v1548, %v1549
      %v1551 = vsel %vm1545, %v1375, 0.0
      %v1552 = vadd.f32 %v1550, %v1551
      %v1553 = vsel %vm1545, %v1377, 0.0
      %v1554 = vadd.f32 %v1552, %v1553
      %v1555 = vsel %vm1545, %v1379, 0.0
      %v1556 = vadd.f32 %v1554, %v1555
      %v1557 = vsel %vm1545, %v1381, 0.0
      %v1558 = vadd.f32 %v1556, %v1557
      %v1559 = vsel %vm1545, %v1383, 0.0
      %v1560 = vadd.f32 %v1558, %v1559
      %v1561 = vsel %vm1545, %v1385, 0.0
      %v1562 = vadd.f32 %v1560, %v1561
      %v1563 = vsel %vm1545, %v1387, 0.0
      %v1564 = vadd.f32 %v1562, %v1563
      %v1565 = vsel %vm1545, %v1389, 0.0
      %v1566 = vadd.f32 %v1564, %v1565
      %v1567 = vsel %vm1545, %v1370, 0.0
      %v1568 = vsel %vm1545, %v1372, 0.0
      %v1569 = vadd.f32 %v1567, %v1568
      %v1570 = vsel %vm1545, %v1374, 0.0
      %v1571 = vadd.f32 %v1569, %v1570
      %v1572 = vsel %vm1545, %v1376, 0.0
      %v1573 = vadd.f32 %v1571, %v1572
      %v1574 = vsel %vm1545, %v1378, 0.0
      %v1575 = vadd.f32 %v1573, %v1574
      %v1576 = vsel %vm1545, %v1380, 0.0
      %v1577 = vadd.f32 %v1575, %v1576
      %v1578 = vsel %vm1545, %v1382, 0.0
      %v1579 = vadd.f32 %v1577, %v1578
      %v1580 = vsel %vm1545, %v1384, 0.0
      %v1581 = vadd.f32 %v1579, %v1580
      %v1582 = vsel %vm1545, %v1386, 0.0
      %v1583 = vadd.f32 %v1581, %v1582
      %v1584 = vsel %vm1545, %v1388, 0.0
      %v1585 = vadd.f32 %v1583, %v1584
      %v1586 = vsel %vm1545, %v1390, 0.0
      %v1587 = vadd.f32 %v1585, %v1586
      %v1588 = vsel %vm1545, %v1391, 0.0
      %v1589 = vsel %vm1545, %v1393, 0.0
      %v1590 = vadd.f32 %v1588, %v1589
      %v1591 = vsel %vm1545, %v1395, 0.0
      %v1592 = vadd.f32 %v1590, %v1591
      %v1593 = vsel %vm1545, %v1397, 0.0
      %v1594 = vadd.f32 %v1592, %v1593
      %v1595 = vsel %vm1545, %v1399, 0.0
      %v1596 = vadd.f32 %v1594, %v1595
      %v1597 = vsel %vm1545, %v1401, 0.0
      %v1598 = vadd.f32 %v1596, %v1597
      %v1599 = vsel %vm1545, %v1403, 0.0
      %v1600 = vadd.f32 %v1598, %v1599
      %v1601 = vsel %vm1545, %v1405, 0.0
      %v1602 = vadd.f32 %v1600, %v1601
      %v1603 = vsel %vm1545, %v1407, 0.0
      %v1604 = vadd.f32 %v1602, %v1603
      %v1605 = vsel %vm1545, %v1409, 0.0
      %v1606 = vadd.f32 %v1604, %v1605
      %v1607 = vsel %vm1545, %v1411, 0.0
      %v1608 = vadd.f32 %v1606, %v1607
      %v1609 = vsel %vm1545, %v1392, 0.0
      %v1610 = vsel %vm1545, %v1394, 0.0
      %v1611 = vadd.f32 %v1609, %v1610
      %v1612 = vsel %vm1545, %v1396, 0.0
      %v1613 = vadd.f32 %v1611, %v1612
      %v1614 = vsel %vm1545, %v1398, 0.0
      %v1615 = vadd.f32 %v1613, %v1614
      %v1616 = vsel %vm1545, %v1400, 0.0
      %v1617 = vadd.f32 %v1615, %v1616
      %v1618 = vsel %vm1545, %v1402, 0.0
      %v1619 = vadd.f32 %v1617, %v1618
      %v1620 = vsel %vm1545, %v1404, 0.0
      %v1621 = vadd.f32 %v1619, %v1620
      %v1622 = vsel %vm1545, %v1406, 0.0
      %v1623 = vadd.f32 %v1621, %v1622
      %v1624 = vsel %vm1545, %v1408, 0.0
      %v1625 = vadd.f32 %v1623, %v1624
      %v1626 = vsel %vm1545, %v1410, 0.0
      %v1627 = vadd.f32 %v1625, %v1626
      %v1628 = vsel %vm1545, %v1412, 0.0
      %v1629 = vadd.f32 %v1627, %v1628
      %v1630 = vsel %vm1545, %v1413, 0.0
      %v1631 = vsel %vm1545, %v1415, 0.0
      %v1632 = vadd.f32 %v1630, %v1631
      %v1633 = vsel %vm1545, %v1417, 0.0
      %v1634 = vadd.f32 %v1632, %v1633
      %v1635 = vsel %vm1545, %v1419, 0.0
      %v1636 = vadd.f32 %v1634, %v1635
      %v1637 = vsel %vm1545, %v1421, 0.0
      %v1638 = vadd.f32 %v1636, %v1637
      %v1639 = vsel %vm1545, %v1423, 0.0
      %v1640 = vadd.f32 %v1638, %v1639
      %v1641 = vsel %vm1545, %v1425, 0.0
      %v1642 = vadd.f32 %v1640, %v1641
      %v1643 = vsel %vm1545, %v1427, 0.0
      %v1644 = vadd.f32 %v1642, %v1643
      %v1645 = vsel %vm1545, %v1429, 0.0
      %v1646 = vadd.f32 %v1644, %v1645
      %v1647 = vsel %vm1545, %v1431, 0.0
      %v1648 = vadd.f32 %v1646, %v1647
      %v1649 = vsel %vm1545, %v1433, 0.0
      %v1650 = vadd.f32 %v1648, %v1649
      %v1651 = vsel %vm1545, %v1414, 0.0
      %v1652 = vsel %vm1545, %v1416, 0.0
      %v1653 = vadd.f32 %v1651, %v1652
      %v1654 = vsel %vm1545, %v1418, 0.0
      %v1655 = vadd.f32 %v1653, %v1654
      %v1656 = vsel %vm1545, %v1420, 0.0
      %v1657 = vadd.f32 %v1655, %v1656
      %v1658 = vsel %vm1545, %v1422, 0.0
      %v1659 = vadd.f32 %v1657, %v1658
      %v1660 = vsel %vm1545, %v1424, 0.0
      %v1661 = vadd.f32 %v1659, %v1660
      %v1662 = vsel %vm1545, %v1426, 0.0
      %v1663 = vadd.f32 %v1661, %v1662
      %v1664 = vsel %vm1545, %v1428, 0.0
      %v1665 = vadd.f32 %v1663, %v1664
      %v1666 = vsel %vm1545, %v1430, 0.0
      %v1667 = vadd.f32 %v1665, %v1666
      %v1668 = vsel %vm1545, %v1432, 0.0
      %v1669 = vadd.f32 %v1667, %v1668
      %v1670 = vsel %vm1545, %v1434, 0.0
      %v1671 = vadd.f32 %v1669, %v1670
      %v1672 = vsel %vm1545, %v1435, 0.0
      %v1673 = vsel %vm1545, %v1437, 0.0
      %v1674 = vadd.f32 %v1672, %v1673
      %v1675 = vsel %vm1545, %v1439, 0.0
      %v1676 = vadd.f32 %v1674, %v1675
      %v1677 = vsel %vm1545, %v1441, 0.0
      %v1678 = vadd.f32 %v1676, %v1677
      %v1679 = vsel %vm1545, %v1443, 0.0
      %v1680 = vadd.f32 %v1678, %v1679
      %v1681 = vsel %vm1545, %v1445, 0.0
      %v1682 = vadd.f32 %v1680, %v1681
      %v1683 = vsel %vm1545, %v1447, 0.0
      %v1684 = vadd.f32 %v1682, %v1683
      %v1685 = vsel %vm1545, %v1449, 0.0
      %v1686 = vadd.f32 %v1684, %v1685
      %v1687 = vsel %vm1545, %v1451, 0.0
      %v1688 = vadd.f32 %v1686, %v1687
      %v1689 = vsel %vm1545, %v1453, 0.0
      %v1690 = vadd.f32 %v1688, %v1689
      %v1691 = vsel %vm1545, %v1455, 0.0
      %v1692 = vadd.f32 %v1690, %v1691
      %v1693 = vsel %vm1545, %v1436, 0.0
      %v1694 = vsel %vm1545, %v1438, 0.0
      %v1695 = vadd.f32 %v1693, %v1694
      %v1696 = vsel %vm1545, %v1440, 0.0
      %v1697 = vadd.f32 %v1695, %v1696
      %v1698 = vsel %vm1545, %v1442, 0.0
      %v1699 = vadd.f32 %v1697, %v1698
      %v1700 = vsel %vm1545, %v1444, 0.0
      %v1701 = vadd.f32 %v1699, %v1700
      %v1702 = vsel %vm1545, %v1446, 0.0
      %v1703 = vadd.f32 %v1701, %v1702
      %v1704 = vsel %vm1545, %v1448, 0.0
      %v1705 = vadd.f32 %v1703, %v1704
      %v1706 = vsel %vm1545, %v1450, 0.0
      %v1707 = vadd.f32 %v1705, %v1706
      %v1708 = vsel %vm1545, %v1452, 0.0
      %v1709 = vadd.f32 %v1707, %v1708
      %v1710 = vsel %vm1545, %v1454, 0.0
      %v1711 = vadd.f32 %v1709, %v1710
      %v1712 = vsel %vm1545, %v1456, 0.0
      %v1713 = vadd.f32 %v1711, %v1712
      %v1714 = vsel %vm1545, %v1457, 0.0
      %v1715 = vsel %vm1545, %v1459, 0.0
      %v1716 = vadd.f32 %v1714, %v1715
      %v1717 = vsel %vm1545, %v1461, 0.0
      %v1718 = vadd.f32 %v1716, %v1717
      %v1719 = vsel %vm1545, %v1463, 0.0
      %v1720 = vadd.f32 %v1718, %v1719
      %v1721 = vsel %vm1545, %v1465, 0.0
      %v1722 = vadd.f32 %v1720, %v1721
      %v1723 = vsel %vm1545, %v1467, 0.0
      %v1724 = vadd.f32 %v1722, %v1723
      %v1725 = vsel %vm1545, %v1469, 0.0
      %v1726 = vadd.f32 %v1724, %v1725
      %v1727 = vsel %vm1545, %v1471, 0.0
      %v1728 = vadd.f32 %v1726, %v1727
      %v1729 = vsel %vm1545, %v1473, 0.0
      %v1730 = vadd.f32 %v1728, %v1729
      %v1731 = vsel %vm1545, %v1475, 0.0
      %v1732 = vadd.f32 %v1730, %v1731
      %v1733 = vsel %vm1545, %v1477, 0.0
      %v1734 = vadd.f32 %v1732, %v1733
      %v1735 = vsel %vm1545, %v1458, 0.0
      %v1736 = vsel %vm1545, %v1460, 0.0
      %v1737 = vadd.f32 %v1735, %v1736
      %v1738 = vsel %vm1545, %v1462, 0.0
      %v1739 = vadd.f32 %v1737, %v1738
      %v1740 = vsel %vm1545, %v1464, 0.0
      %v1741 = vadd.f32 %v1739, %v1740
      %v1742 = vsel %vm1545, %v1466, 0.0
      %v1743 = vadd.f32 %v1741, %v1742
      %v1744 = vsel %vm1545, %v1468, 0.0
      %v1745 = vadd.f32 %v1743, %v1744
      %v1746 = vsel %vm1545, %v1470, 0.0
      %v1747 = vadd.f32 %v1745, %v1746
      %v1748 = vsel %vm1545, %v1472, 0.0
      %v1749 = vadd.f32 %v1747, %v1748
      %v1750 = vsel %vm1545, %v1474, 0.0
      %v1751 = vadd.f32 %v1749, %v1750
      %v1752 = vsel %vm1545, %v1476, 0.0
      %v1753 = vadd.f32 %v1751, %v1752
      %v1754 = vsel %vm1545, %v1478, 0.0
      %v1755 = vadd.f32 %v1753, %v1754
      %v1756 = vsel %vm1545, %v1479, 0.0
      %v1757 = vsel %vm1545, %v1481, 0.0
      %v1758 = vadd.f32 %v1756, %v1757
      %v1759 = vsel %vm1545, %v1483, 0.0
      %v1760 = vadd.f32 %v1758, %v1759
      %v1761 = vsel %vm1545, %v1485, 0.0
      %v1762 = vadd.f32 %v1760, %v1761
      %v1763 = vsel %vm1545, %v1487, 0.0
      %v1764 = vadd.f32 %v1762, %v1763
      %v1765 = vsel %vm1545, %v1489, 0.0
      %v1766 = vadd.f32 %v1764, %v1765
      %v1767 = vsel %vm1545, %v1491, 0.0
      %v1768 = vadd.f32 %v1766, %v1767
      %v1769 = vsel %vm1545, %v1493, 0.0
      %v1770 = vadd.f32 %v1768, %v1769
      %v1771 = vsel %vm1545, %v1495, 0.0
      %v1772 = vadd.f32 %v1770, %v1771
      %v1773 = vsel %vm1545, %v1497, 0.0
      %v1774 = vadd.f32 %v1772, %v1773
      %v1775 = vsel %vm1545, %v1499, 0.0
      %v1776 = vadd.f32 %v1774, %v1775
      %v1777 = vsel %vm1545, %v1480, 0.0
      %v1778 = vsel %vm1545, %v1482, 0.0
      %v1779 = vadd.f32 %v1777, %v1778
      %v1780 = vsel %vm1545, %v1484, 0.0
      %v1781 = vadd.f32 %v1779, %v1780
      %v1782 = vsel %vm1545, %v1486, 0.0
      %v1783 = vadd.f32 %v1781, %v1782
      %v1784 = vsel %vm1545, %v1488, 0.0
      %v1785 = vadd.f32 %v1783, %v1784
      %v1786 = vsel %vm1545, %v1490, 0.0
      %v1787 = vadd.f32 %v1785, %v1786
      %v1788 = vsel %vm1545, %v1492, 0.0
      %v1789 = vadd.f32 %v1787, %v1788
      %v1790 = vsel %vm1545, %v1494, 0.0
      %v1791 = vadd.f32 %v1789, %v1790
      %v1792 = vsel %vm1545, %v1496, 0.0
      %v1793 = vadd.f32 %v1791, %v1792
      %v1794 = vsel %vm1545, %v1498, 0.0
      %v1795 = vadd.f32 %v1793, %v1794
      %v1796 = vsel %vm1545, %v1500, 0.0
      %v1797 = vadd.f32 %v1795, %v1796
      %v1798 = vsel %vm1545, %v1501, 0.0
      %v1799 = vsel %vm1545, %v1503, 0.0
      %v1800 = vadd.f32 %v1798, %v1799
      %v1801 = vsel %vm1545, %v1505, 0.0
      %v1802 = vadd.f32 %v1800, %v1801
      %v1803 = vsel %vm1545, %v1507, 0.0
      %v1804 = vadd.f32 %v1802, %v1803
      %v1805 = vsel %vm1545, %v1509, 0.0
      %v1806 = vadd.f32 %v1804, %v1805
      %v1807 = vsel %vm1545, %v1511, 0.0
      %v1808 = vadd.f32 %v1806, %v1807
      %v1809 = vsel %vm1545, %v1513, 0.0
      %v1810 = vadd.f32 %v1808, %v1809
      %v1811 = vsel %vm1545, %v1515, 0.0
      %v1812 = vadd.f32 %v1810, %v1811
      %v1813 = vsel %vm1545, %v1517, 0.0
      %v1814 = vadd.f32 %v1812, %v1813
      %v1815 = vsel %vm1545, %v1519, 0.0
      %v1816 = vadd.f32 %v1814, %v1815
      %v1817 = vsel %vm1545, %v1521, 0.0
      %v1818 = vadd.f32 %v1816, %v1817
      %v1819 = vsel %vm1545, %v1502, 0.0
      %v1820 = vsel %vm1545, %v1504, 0.0
      %v1821 = vadd.f32 %v1819, %v1820
      %v1822 = vsel %vm1545, %v1506, 0.0
      %v1823 = vadd.f32 %v1821, %v1822
      %v1824 = vsel %vm1545, %v1508, 0.0
      %v1825 = vadd.f32 %v1823, %v1824
      %v1826 = vsel %vm1545, %v1510, 0.0
      %v1827 = vadd.f32 %v1825, %v1826
      %v1828 = vsel %vm1545, %v1512, 0.0
      %v1829 = vadd.f32 %v1827, %v1828
      %v1830 = vsel %vm1545, %v1514, 0.0
      %v1831 = vadd.f32 %v1829, %v1830
      %v1832 = vsel %vm1545, %v1516, 0.0
      %v1833 = vadd.f32 %v1831, %v1832
      %v1834 = vsel %vm1545, %v1518, 0.0
      %v1835 = vadd.f32 %v1833, %v1834
      %v1836 = vsel %vm1545, %v1520, 0.0
      %v1837 = vadd.f32 %v1835, %v1836
      %v1838 = vsel %vm1545, %v1522, 0.0
      %v1839 = vadd.f32 %v1837, %v1838
      %v1840 = vsel %vm1545, %v1523, 0.0
      %v1841 = vsel %vm1545, %v1525, 0.0
      %v1842 = vadd.f32 %v1840, %v1841
      %v1843 = vsel %vm1545, %v1527, 0.0
      %v1844 = vadd.f32 %v1842, %v1843
      %v1845 = vsel %vm1545, %v1529, 0.0
      %v1846 = vadd.f32 %v1844, %v1845
      %v1847 = vsel %vm1545, %v1531, 0.0
      %v1848 = vadd.f32 %v1846, %v1847
      %v1849 = vsel %vm1545, %v1533, 0.0
      %v1850 = vadd.f32 %v1848, %v1849
      %v1851 = vsel %vm1545, %v1535, 0.0
      %v1852 = vadd.f32 %v1850, %v1851
      %v1853 = vsel %vm1545, %v1537, 0.0
      %v1854 = vadd.f32 %v1852, %v1853
      %v1855 = vsel %vm1545, %v1539, 0.0
      %v1856 = vadd.f32 %v1854, %v1855
      %v1857 = vsel %vm1545, %v1541, 0.0
      %v1858 = vadd.f32 %v1856, %v1857
      %v1859 = vsel %vm1545, %v1543, 0.0
      %v1860 = vadd.f32 %v1858, %v1859
      %v1861 = vsel %vm1545, %v1524, 0.0
      %v1862 = vsel %vm1545, %v1526, 0.0
      %v1863 = vadd.f32 %v1861, %v1862
      %v1864 = vsel %vm1545, %v1528, 0.0
      %v1865 = vadd.f32 %v1863, %v1864
      %v1866 = vsel %vm1545, %v1530, 0.0
      %v1867 = vadd.f32 %v1865, %v1866
      %v1868 = vsel %vm1545, %v1532, 0.0
      %v1869 = vadd.f32 %v1867, %v1868
      %v1870 = vsel %vm1545, %v1534, 0.0
      %v1871 = vadd.f32 %v1869, %v1870
      %v1872 = vsel %vm1545, %v1536, 0.0
      %v1873 = vadd.f32 %v1871, %v1872
      %v1874 = vsel %vm1545, %v1538, 0.0
      %v1875 = vadd.f32 %v1873, %v1874
      %v1876 = vsel %vm1545, %v1540, 0.0
      %v1877 = vadd.f32 %v1875, %v1876
      %v1878 = vsel %vm1545, %v1542, 0.0
      %v1879 = vadd.f32 %v1877, %v1878
      %v1880 = vsel %vm1545, %v1544, 0.0
      %v1881 = vadd.f32 %v1879, %v1880
      %p1882 = scmp.eq.s32.totalorder %s19, 0
      // Predicated region
      $region33: #{ctc_loss_pallas.1} parent=31 // pred_check
        %p1883 = pneg %p1882
      $region34: #{ctc_loss_pallas.1} parent=31 // pred_check_branch
        %1885 = sbr.rel (%p1883) target = $region36
      $region35: #{ctc_loss_pallas.1} parent=31 // pred_region
        %vm1886 = vcmp.le.s32.totalorder %v246, 1
        %vm1887 = vcmp.le.s32.totalorder %v247, 1
        %vm1888 = vmand %vm1886, %vm254
        %vm1889 = vmand %vm1887, %vm255
        %v1890 = vsel %vm1888, %v1566, -1e+30
        %v1891 = vsel %vm1889, %v1587, -1e+30
        %vm1894 = vcmask 1040384
        %v1895 = vrot.slane %v1890, 7
        %v1896 = vrot.slane %v1891, 7
        %v1897 = vsel %vm1894, %v1895, %v1896
        %v1900 = vsel %vm1894, -1e+30, %v1895
        %v1901 = vrot.slane %v1890, 6
        %v1902 = vrot.slane %v1891, 6
        %v1903 = vsel %vm256, %v1901, %v1902
        %v1906 = vsel %vm256, -1e+30, %v1901
        %v1907 = vsel %vm269, %v1906, -1e+30
        %v1908 = vsel %vm270, %v1903, -1e+30
        %v1909 = vmax.f32 %v1900, %v1907
        %v1910 = vmax.f32 %v1897, %v1908
        %v1911 = vmax.f32 %v1890, %v1909
        %v1912 = vmax.f32 %v1891, %v1910
        %v1913 = vsub.f32 %v1890, %v1911
        %v1914 = vsub.f32 %v1891, %v1912
        %v1915 = vmul.f32 %v1913, 1.442695
        %v1916 = vpow.pop %v1915
        %v1917 = vmul.f32 %v1914, 1.442695
        %v1918 = vpow.pop %v1917
        %v1919 = vsub.f32 %v1900, %v1911
        %v1920 = vsub.f32 %v1897, %v1912
        %v1921 = vmul.f32 %v1919, 1.442695
        %v1922 = vpow.pop %v1921
        %v1923 = vmul.f32 %v1920, 1.442695
        %v1924 = vpow.pop %v1923
        %v1925 = vadd.f32 %v1916, %v1922
        %v1926 = vadd.f32 %v1918, %v1924
        %v1927 = vsub.f32 %v1907, %v1911
        %v1928 = vsub.f32 %v1908, %v1912
        %v1929 = vmul.f32 %v1927, 1.442695
        %v1930 = vpow.pop %v1929
        %v1931 = vmul.f32 %v1928, 1.442695
        %v1932 = vpow.pop %v1931
        %v1933 = vadd.f32 %v1925, %v1930
        %v1934 = vadd.f32 %v1926, %v1932
        %v1935 = vlog2.pop %v1933
        %v1936 = vmul.f32 %v1935, 0.6931472
        %v1937 = vlog2.pop %v1934
        %v1938 = vmul.f32 %v1937, 0.6931472
        %v1939 = vadd.f32 %v1911, %v1936
        %v1940 = vadd.f32 %v1912, %v1938
        %v1941 = vadd.f32 %v1608, %v1939
        %v1942 = vadd.f32 %v1629, %v1940
        %v1943 = vsel %vm254, %v1941, -1e+30
        %v1944 = vsel %vm255, %v1942, -1e+30
        %v1947 = vrot.slane %v1943, 7
        %v1948 = vrot.slane %v1944, 7
        %v1949 = vsel %vm1894, %v1947, %v1948
        %v1952 = vsel %vm1894, -1e+30, %v1947
        %v1953 = vrot.slane %v1943, 6
        %v1954 = vrot.slane %v1944, 6
        %v1955 = vsel %vm256, %v1953, %v1954
        %v1958 = vsel %vm256, -1e+30, %v1953
        %v1959 = vsel %vm269, %v1958, -1e+30
        %v1960 = vsel %vm270, %v1955, -1e+30
        %v1961 = vmax.f32 %v1952, %v1959
        %v1962 = vmax.f32 %v1949, %v1960
        %v1963 = vmax.f32 %v1943, %v1961
        %v1964 = vmax.f32 %v1944, %v1962
        %v1965 = vsub.f32 %v1943, %v1963
        %v1966 = vsub.f32 %v1944, %v1964
        %v1967 = vmul.f32 %v1965, 1.442695
        %v1968 = vpow.pop %v1967
        %v1969 = vmul.f32 %v1966, 1.442695
        %v1970 = vpow.pop %v1969
        %v1971 = vsub.f32 %v1952, %v1963
        %v1972 = vsub.f32 %v1949, %v1964
        %v1973 = vmul.f32 %v1971, 1.442695
        %v1974 = vpow.pop %v1973
        %v1975 = vmul.f32 %v1972, 1.442695
        %v1976 = vpow.pop %v1975
        %v1977 = vadd.f32 %v1968, %v1974
        %v1978 = vadd.f32 %v1970, %v1976
        %v1979 = vsub.f32 %v1959, %v1963
        %v1980 = vsub.f32 %v1960, %v1964
        %v1981 = vmul.f32 %v1979, 1.442695
        %v1982 = vpow.pop %v1981
        %v1983 = vmul.f32 %v1980, 1.442695
        %v1984 = vpow.pop %v1983
        %v1985 = vadd.f32 %v1977, %v1982
        %v1986 = vadd.f32 %v1978, %v1984
        %v1987 = vlog2.pop %v1985
        %v1988 = vmul.f32 %v1987, 0.6931472
        %v1989 = vlog2.pop %v1986
        %v1990 = vmul.f32 %v1989, 0.6931472
        %v1991 = vadd.f32 %v1963, %v1988
        %v1992 = vadd.f32 %v1964, %v1990
        %v1993 = vadd.f32 %v1650, %v1991
        %v1994 = vadd.f32 %v1671, %v1992
        %v1995 = vsel %vm254, %v1993, -1e+30
        %v1996 = vsel %vm255, %v1994, -1e+30
        %v1999 = vrot.slane %v1995, 7
        %v2000 = vrot.slane %v1996, 7
        %v2001 = vsel %vm1894, %v1999, %v2000
        %v2004 = vsel %vm1894, -1e+30, %v1999
        %v2005 = vrot.slane %v1995, 6
        %v2006 = vrot.slane %v1996, 6
        %v2007 = vsel %vm256, %v2005, %v2006
        %v2010 = vsel %vm256, -1e+30, %v2005
        %v2011 = vsel %vm269, %v2010, -1e+30
        %v2012 = vsel %vm270, %v2007, -1e+30
        %v2013 = vmax.f32 %v2004, %v2011
        %v2014 = vmax.f32 %v2001, %v2012
        %v2015 = vmax.f32 %v1995, %v2013
        %v2016 = vmax.f32 %v1996, %v2014
        %v2017 = vsub.f32 %v1995, %v2015
        %v2018 = vsub.f32 %v1996, %v2016
        %v2019 = vmul.f32 %v2017, 1.442695
        %v2020 = vpow.pop %v2019
        %v2021 = vmul.f32 %v2018, 1.442695
        %v2022 = vpow.pop %v2021
        %v2023 = vsub.f32 %v2004, %v2015
        %v2024 = vsub.f32 %v2001, %v2016
        %v2025 = vmul.f32 %v2023, 1.442695
        %v2026 = vpow.pop %v2025
        %v2027 = vmul.f32 %v2024, 1.442695
        %v2028 = vpow.pop %v2027
        %v2029 = vadd.f32 %v2020, %v2026
        %v2030 = vadd.f32 %v2022, %v2028
        %v2031 = vsub.f32 %v2011, %v2015
        %v2032 = vsub.f32 %v2012, %v2016
        %v2033 = vmul.f32 %v2031, 1.442695
        %v2034 = vpow.pop %v2033
        %v2035 = vmul.f32 %v2032, 1.442695
        %v2036 = vpow.pop %v2035
        %v2037 = vadd.f32 %v2029, %v2034
        %v2038 = vadd.f32 %v2030, %v2036
        %v2039 = vlog2.pop %v2037
        %v2040 = vmul.f32 %v2039, 0.6931472
        %v2041 = vlog2.pop %v2038
        %v2042 = vmul.f32 %v2041, 0.6931472
        %v2043 = vadd.f32 %v2015, %v2040
        %v2044 = vadd.f32 %v2016, %v2042
        %v2045 = vadd.f32 %v1692, %v2043
        %v2046 = vadd.f32 %v1713, %v2044
        %v2047 = vsel %vm254, %v2045, -1e+30
        %v2048 = vsel %vm255, %v2046, -1e+30
        %v2051 = vrot.slane %v2047, 7
        %v2052 = vrot.slane %v2048, 7
        %v2053 = vsel %vm1894, %v2051, %v2052
        %v2056 = vsel %vm1894, -1e+30, %v2051
        %v2057 = vrot.slane %v2047, 6
        %v2058 = vrot.slane %v2048, 6
        %v2059 = vsel %vm256, %v2057, %v2058
        %v2062 = vsel %vm256, -1e+30, %v2057
        %v2063 = vsel %vm269, %v2062, -1e+30
        %v2064 = vsel %vm270, %v2059, -1e+30
        %v2065 = vmax.f32 %v2056, %v2063
        %v2066 = vmax.f32 %v2053, %v2064
        %v2067 = vmax.f32 %v2047, %v2065
        %v2068 = vmax.f32 %v2048, %v2066
        %v2069 = vsub.f32 %v2047, %v2067
        %v2070 = vsub.f32 %v2048, %v2068
        %v2071 = vmul.f32 %v2069, 1.442695
        %v2072 = vpow.pop %v2071
        %v2073 = vmul.f32 %v2070, 1.442695
        %v2074 = vpow.pop %v2073
        %v2075 = vsub.f32 %v2056, %v2067
        %v2076 = vsub.f32 %v2053, %v2068
        %v2077 = vmul.f32 %v2075, 1.442695
        %v2078 = vpow.pop %v2077
        %v2079 = vmul.f32 %v2076, 1.442695
        %v2080 = vpow.pop %v2079
        %v2081 = vadd.f32 %v2072, %v2078
        %v2082 = vadd.f32 %v2074, %v2080
        %v2083 = vsub.f32 %v2063, %v2067
        %v2084 = vsub.f32 %v2064, %v2068
        %v2085 = vmul.f32 %v2083, 1.442695
        %v2086 = vpow.pop %v2085
        %v2087 = vmul.f32 %v2084, 1.442695
        %v2088 = vpow.pop %v2087
        %v2089 = vadd.f32 %v2081, %v2086
        %v2090 = vadd.f32 %v2082, %v2088
        %v2091 = vlog2.pop %v2089
        %v2092 = vmul.f32 %v2091, 0.6931472
        %v2093 = vlog2.pop %v2090
        %v2094 = vmul.f32 %v2093, 0.6931472
        %v2095 = vadd.f32 %v2067, %v2092
        %v2096 = vadd.f32 %v2068, %v2094
        %v2097 = vadd.f32 %v1734, %v2095
        %v2098 = vadd.f32 %v1755, %v2096
        %v2099 = vsel %vm254, %v2097, -1e+30
        %v2100 = vsel %vm255, %v2098, -1e+30
        %v2103 = vrot.slane %v2099, 7
        %v2104 = vrot.slane %v2100, 7
        %v2105 = vsel %vm1894, %v2103, %v2104
        %v2108 = vsel %vm1894, -1e+30, %v2103
        %v2109 = vrot.slane %v2099, 6
        %v2110 = vrot.slane %v2100, 6
        %v2111 = vsel %vm256, %v2109, %v2110
        %v2114 = vsel %vm256, -1e+30, %v2109
        %v2115 = vsel %vm269, %v2114, -1e+30
        %v2116 = vsel %vm270, %v2111, -1e+30
        %v2117 = vmax.f32 %v2108, %v2115
        %v2118 = vmax.f32 %v2105, %v2116
        %v2119 = vmax.f32 %v2099, %v2117
        %v2120 = vmax.f32 %v2100, %v2118
        %v2121 = vsub.f32 %v2099, %v2119
        %v2122 = vsub.f32 %v2100, %v2120
        %v2123 = vmul.f32 %v2121, 1.442695
        %v2124 = vpow.pop %v2123
        %v2125 = vmul.f32 %v2122, 1.442695
        %v2126 = vpow.pop %v2125
        %v2127 = vsub.f32 %v2108, %v2119
        %v2128 = vsub.f32 %v2105, %v2120
        %v2129 = vmul.f32 %v2127, 1.442695
        %v2130 = vpow.pop %v2129
        %v2131 = vmul.f32 %v2128, 1.442695
        %v2132 = vpow.pop %v2131
        %v2133 = vadd.f32 %v2124, %v2130
        %v2134 = vadd.f32 %v2126, %v2132
        %v2135 = vsub.f32 %v2115, %v2119
        %v2136 = vsub.f32 %v2116, %v2120
        %v2137 = vmul.f32 %v2135, 1.442695
        %v2138 = vpow.pop %v2137
        %v2139 = vmul.f32 %v2136, 1.442695
        %v2140 = vpow.pop %v2139
        %v2141 = vadd.f32 %v2133, %v2138
        %v2142 = vadd.f32 %v2134, %v2140
        %v2143 = vlog2.pop %v2141
        %v2144 = vmul.f32 %v2143, 0.6931472
        %v2145 = vlog2.pop %v2142
        %v2146 = vmul.f32 %v2145, 0.6931472
        %v2147 = vadd.f32 %v2119, %v2144
        %v2148 = vadd.f32 %v2120, %v2146
        %v2149 = vadd.f32 %v1776, %v2147
        %v2150 = vadd.f32 %v1797, %v2148
        %v2151 = vsel %vm254, %v2149, -1e+30
        %v2152 = vsel %vm255, %v2150, -1e+30
        %v2155 = vrot.slane %v2151, 7
        %v2156 = vrot.slane %v2152, 7
        %v2157 = vsel %vm1894, %v2155, %v2156
        %v2160 = vsel %vm1894, -1e+30, %v2155
        %v2161 = vrot.slane %v2151, 6
        %v2162 = vrot.slane %v2152, 6
        %v2163 = vsel %vm256, %v2161, %v2162
        %v2166 = vsel %vm256, -1e+30, %v2161
        %v2167 = vsel %vm269, %v2166, -1e+30
        %v2168 = vsel %vm270, %v2163, -1e+30
        %v2169 = vmax.f32 %v2160, %v2167
        %v2170 = vmax.f32 %v2157, %v2168
        %v2171 = vmax.f32 %v2151, %v2169
        %v2172 = vmax.f32 %v2152, %v2170
        %v2173 = vsub.f32 %v2151, %v2171
        %v2174 = vsub.f32 %v2152, %v2172
        %v2175 = vmul.f32 %v2173, 1.442695
        %v2176 = vpow.pop %v2175
        %v2177 = vmul.f32 %v2174, 1.442695
        %v2178 = vpow.pop %v2177
        %v2179 = vsub.f32 %v2160, %v2171
        %v2180 = vsub.f32 %v2157, %v2172
        %v2181 = vmul.f32 %v2179, 1.442695
        %v2182 = vpow.pop %v2181
        %v2183 = vmul.f32 %v2180, 1.442695
        %v2184 = vpow.pop %v2183
        %v2185 = vadd.f32 %v2176, %v2182
        %v2186 = vadd.f32 %v2178, %v2184
        %v2187 = vsub.f32 %v2167, %v2171
        %v2188 = vsub.f32 %v2168, %v2172
        %v2189 = vmul.f32 %v2187, 1.442695
        %v2190 = vpow.pop %v2189
        %v2191 = vmul.f32 %v2188, 1.442695
        %v2192 = vpow.pop %v2191
        %v2193 = vadd.f32 %v2185, %v2190
        %v2194 = vadd.f32 %v2186, %v2192
        %v2195 = vlog2.pop %v2193
        %v2196 = vmul.f32 %v2195, 0.6931472
        %v2197 = vlog2.pop %v2194
        %v2198 = vmul.f32 %v2197, 0.6931472
        %v2199 = vadd.f32 %v2171, %v2196
        %v2200 = vadd.f32 %v2172, %v2198
        %v2201 = vadd.f32 %v1818, %v2199
        %v2202 = vadd.f32 %v1839, %v2200
        %v2203 = vsel %vm254, %v2201, -1e+30
        %v2204 = vsel %vm255, %v2202, -1e+30
        %v2207 = vrot.slane %v2203, 7
        %v2208 = vrot.slane %v2204, 7
        %v2209 = vsel %vm1894, %v2207, %v2208
        %v2212 = vsel %vm1894, -1e+30, %v2207
        %v2213 = vrot.slane %v2203, 6
        %v2214 = vrot.slane %v2204, 6
        %v2215 = vsel %vm256, %v2213, %v2214
        %v2218 = vsel %vm256, -1e+30, %v2213
        %v2219 = vsel %vm269, %v2218, -1e+30
        %v2220 = vsel %vm270, %v2215, -1e+30
        %v2221 = vmax.f32 %v2212, %v2219
        %v2222 = vmax.f32 %v2209, %v2220
        %v2223 = vmax.f32 %v2203, %v2221
        %v2224 = vmax.f32 %v2204, %v2222
        %v2225 = vsub.f32 %v2203, %v2223
        %v2226 = vsub.f32 %v2204, %v2224
        %v2227 = vmul.f32 %v2225, 1.442695
        %v2228 = vpow.pop %v2227
        %v2229 = vmul.f32 %v2226, 1.442695
        %v2230 = vpow.pop %v2229
        %v2231 = vsub.f32 %v2212, %v2223
        %v2232 = vsub.f32 %v2209, %v2224
        %v2233 = vmul.f32 %v2231, 1.442695
        %v2234 = vpow.pop %v2233
        %v2235 = vmul.f32 %v2232, 1.442695
        %v2236 = vpow.pop %v2235
        %v2237 = vadd.f32 %v2228, %v2234
        %v2238 = vadd.f32 %v2230, %v2236
        %v2239 = vsub.f32 %v2219, %v2223
        %v2240 = vsub.f32 %v2220, %v2224
        %v2241 = vmul.f32 %v2239, 1.442695
        %v2242 = vpow.pop %v2241
        %v2243 = vmul.f32 %v2240, 1.442695
        %v2244 = vpow.pop %v2243
        %v2245 = vadd.f32 %v2237, %v2242
        %v2246 = vadd.f32 %v2238, %v2244
        %v2247 = vlog2.pop %v2245
        %v2248 = vmul.f32 %v2247, 0.6931472
        %v2249 = vlog2.pop %v2246
        %v2250 = vmul.f32 %v2249, 0.6931472
        %v2251 = vadd.f32 %v2223, %v2248
        %v2252 = vadd.f32 %v2224, %v2250
        %v2253 = vadd.f32 %v1860, %v2251
        %v2254 = vadd.f32 %v1881, %v2252
        %v2255 = vsel %vm254, %v2253, -1e+30
        %v2256 = vsel %vm255, %v2254, -1e+30
        %2257 = vst.msk [vmem:[#allocation2] sm:$0xff] %vm1545, %v2255
        %2258 = vst.msk [vmem:[#allocation2 + $0x8] sm:$0xff] %vm1545, %v2256
      $region36: #{ctc_loss_pallas.1} parent=31 // pred_fallthru
        _
      %p2259 = scmp.gt.s32.totalorder %s19, 0
      // Predicated region
      $region37: #{ctc_loss_pallas.1} parent=31 // pred_check
        %p2260 = pneg %p2259
      $region38: #{ctc_loss_pallas.1} parent=31 // pred_check_branch
        %2262 = sbr.rel (%p2260) target = $region40
      $region39: #{ctc_loss_pallas.1} parent=31 // pred_region
        %v2263 = vld [vmem:[#allocation2] sm:$0xff]
        %v2264 = vld [vmem:[#allocation2 + $0x8] sm:$0xff]
        %vm2267 = vcmask 1040384
        %v2268 = vrot.slane %v2263, 7
        %v2269 = vrot.slane %v2264, 7
        %v2270 = vsel %vm2267, %v2268, %v2269
        %v2273 = vsel %vm2267, -1e+30, %v2268
        %v2274 = vrot.slane %v2263, 6
        %v2275 = vrot.slane %v2264, 6
        %v2276 = vsel %vm256, %v2274, %v2275
        %v2279 = vsel %vm256, -1e+30, %v2274
        %v2280 = vsel %vm269, %v2279, -1e+30
        %v2281 = vsel %vm270, %v2276, -1e+30
        %v2282 = vmax.f32 %v2273, %v2280
        %v2283 = vmax.f32 %v2270, %v2281
        %v2284 = vmax.f32 %v2263, %v2282
        %v2285 = vmax.f32 %v2264, %v2283
        %v2286 = vsub.f32 %v2263, %v2284
        %v2287 = vsub.f32 %v2264, %v2285
        %v2288 = vmul.f32 %v2286, 1.442695
        %v2289 = vpow.pop %v2288
        %v2290 = vmul.f32 %v2287, 1.442695
        %v2291 = vpow.pop %v2290
        %v2292 = vsub.f32 %v2273, %v2284
        %v2293 = vsub.f32 %v2270, %v2285
        %v2294 = vmul.f32 %v2292, 1.442695
        %v2295 = vpow.pop %v2294
        %v2296 = vmul.f32 %v2293, 1.442695
        %v2297 = vpow.pop %v2296
        %v2298 = vadd.f32 %v2289, %v2295
        %v2299 = vadd.f32 %v2291, %v2297
        %v2300 = vsub.f32 %v2280, %v2284
        %v2301 = vsub.f32 %v2281, %v2285
        %v2302 = vmul.f32 %v2300, 1.442695
        %v2303 = vpow.pop %v2302
        %v2304 = vmul.f32 %v2301, 1.442695
        %v2305 = vpow.pop %v2304
        %v2306 = vadd.f32 %v2298, %v2303
        %v2307 = vadd.f32 %v2299, %v2305
        %v2308 = vlog2.pop %v2306
        %v2309 = vmul.f32 %v2308, 0.6931472
        %v2310 = vlog2.pop %v2307
        %v2311 = vmul.f32 %v2310, 0.6931472
        %v2312 = vadd.f32 %v2284, %v2309
        %v2313 = vadd.f32 %v2285, %v2311
        %v2314 = vadd.f32 %v1566, %v2312
        %v2315 = vadd.f32 %v1587, %v2313
        %v2316 = vsel %vm254, %v2314, -1e+30
        %v2317 = vsel %vm255, %v2315, -1e+30
        %v2320 = vrot.slane %v2316, 7
        %v2321 = vrot.slane %v2317, 7
        %v2322 = vsel %vm2267, %v2320, %v2321
        %v2325 = vsel %vm2267, -1e+30, %v2320
        %v2326 = vrot.slane %v2316, 6
        %v2327 = vrot.slane %v2317, 6
        %v2328 = vsel %vm256, %v2326, %v2327
        %v2331 = vsel %vm256, -1e+30, %v2326
        %v2332 = vsel %vm269, %v2331, -1e+30
        %v2333 = vsel %vm270, %v2328, -1e+30
        %v2334 = vmax.f32 %v2325, %v2332
        %v2335 = vmax.f32 %v2322, %v2333
        %v2336 = vmax.f32 %v2316, %v2334
        %v2337 = vmax.f32 %v2317, %v2335
        %v2338 = vsub.f32 %v2316, %v2336
        %v2339 = vsub.f32 %v2317, %v2337
        %v2340 = vmul.f32 %v2338, 1.442695
        %v2341 = vpow.pop %v2340
        %v2342 = vmul.f32 %v2339, 1.442695
        %v2343 = vpow.pop %v2342
        %v2344 = vsub.f32 %v2325, %v2336
        %v2345 = vsub.f32 %v2322, %v2337
        %v2346 = vmul.f32 %v2344, 1.442695
        %v2347 = vpow.pop %v2346
        %v2348 = vmul.f32 %v2345, 1.442695
        %v2349 = vpow.pop %v2348
        %v2350 = vadd.f32 %v2341, %v2347
        %v2351 = vadd.f32 %v2343, %v2349
        %v2352 = vsub.f32 %v2332, %v2336
        %v2353 = vsub.f32 %v2333, %v2337
        %v2354 = vmul.f32 %v2352, 1.442695
        %v2355 = vpow.pop %v2354
        %v2356 = vmul.f32 %v2353, 1.442695
        %v2357 = vpow.pop %v2356
        %v2358 = vadd.f32 %v2350, %v2355
        %v2359 = vadd.f32 %v2351, %v2357
        %v2360 = vlog2.pop %v2358
        %v2361 = vmul.f32 %v2360, 0.6931472
        %v2362 = vlog2.pop %v2359
        %v2363 = vmul.f32 %v2362, 0.6931472
        %v2364 = vadd.f32 %v2336, %v2361
        %v2365 = vadd.f32 %v2337, %v2363
        %v2366 = vadd.f32 %v1608, %v2364
        %v2367 = vadd.f32 %v1629, %v2365
        %v2368 = vsel %vm254, %v2366, -1e+30
        %v2369 = vsel %vm255, %v2367, -1e+30
        %v2372 = vrot.slane %v2368, 7
        %v2373 = vrot.slane %v2369, 7
        %v2374 = vsel %vm2267, %v2372, %v2373
        %v2377 = vsel %vm2267, -1e+30, %v2372
        %v2378 = vrot.slane %v2368, 6
        %v2379 = vrot.slane %v2369, 6
        %v2380 = vsel %vm256, %v2378, %v2379
        %v2383 = vsel %vm256, -1e+30, %v2378
        %v2384 = vsel %vm269, %v2383, -1e+30
        %v2385 = vsel %vm270, %v2380, -1e+30
        %v2386 = vmax.f32 %v2377, %v2384
        %v2387 = vmax.f32 %v2374, %v2385
        %v2388 = vmax.f32 %v2368, %v2386
        %v2389 = vmax.f32 %v2369, %v2387
        %v2390 = vsub.f32 %v2368, %v2388
        %v2391 = vsub.f32 %v2369, %v2389
        %v2392 = vmul.f32 %v2390, 1.442695
        %v2393 = vpow.pop %v2392
        %v2394 = vmul.f32 %v2391, 1.442695
        %v2395 = vpow.pop %v2394
        %v2396 = vsub.f32 %v2377, %v2388
        %v2397 = vsub.f32 %v2374, %v2389
        %v2398 = vmul.f32 %v2396, 1.442695
        %v2399 = vpow.pop %v2398
        %v2400 = vmul.f32 %v2397, 1.442695
        %v2401 = vpow.pop %v2400
        %v2402 = vadd.f32 %v2393, %v2399
        %v2403 = vadd.f32 %v2395, %v2401
        %v2404 = vsub.f32 %v2384, %v2388
        %v2405 = vsub.f32 %v2385, %v2389
        %v2406 = vmul.f32 %v2404, 1.442695
        %v2407 = vpow.pop %v2406
        %v2408 = vmul.f32 %v2405, 1.442695
        %v2409 = vpow.pop %v2408
        %v2410 = vadd.f32 %v2402, %v2407
        %v2411 = vadd.f32 %v2403, %v2409
        %v2412 = vlog2.pop %v2410
        %v2413 = vmul.f32 %v2412, 0.6931472
        %v2414 = vlog2.pop %v2411
        %v2415 = vmul.f32 %v2414, 0.6931472
        %v2416 = vadd.f32 %v2388, %v2413
        %v2417 = vadd.f32 %v2389, %v2415
        %v2418 = vadd.f32 %v1650, %v2416
        %v2419 = vadd.f32 %v1671, %v2417
        %v2420 = vsel %vm254, %v2418, -1e+30
        %v2421 = vsel %vm255, %v2419, -1e+30
        %v2424 = vrot.slane %v2420, 7
        %v2425 = vrot.slane %v2421, 7
        %v2426 = vsel %vm2267, %v2424, %v2425
        %v2429 = vsel %vm2267, -1e+30, %v2424
        %v2430 = vrot.slane %v2420, 6
        %v2431 = vrot.slane %v2421, 6
        %v2432 = vsel %vm256, %v2430, %v2431
        %v2435 = vsel %vm256, -1e+30, %v2430
        %v2436 = vsel %vm269, %v2435, -1e+30
        %v2437 = vsel %vm270, %v2432, -1e+30
        %v2438 = vmax.f32 %v2429, %v2436
        %v2439 = vmax.f32 %v2426, %v2437
        %v2440 = vmax.f32 %v2420, %v2438
        %v2441 = vmax.f32 %v2421, %v2439
        %v2442 = vsub.f32 %v2420, %v2440
        %v2443 = vsub.f32 %v2421, %v2441
        %v2444 = vmul.f32 %v2442, 1.442695
        %v2445 = vpow.pop %v2444
        %v2446 = vmul.f32 %v2443, 1.442695
        %v2447 = vpow.pop %v2446
        %v2448 = vsub.f32 %v2429, %v2440
        %v2449 = vsub.f32 %v2426, %v2441
        %v2450 = vmul.f32 %v2448, 1.442695
        %v2451 = vpow.pop %v2450
        %v2452 = vmul.f32 %v2449, 1.442695
        %v2453 = vpow.pop %v2452
        %v2454 = vadd.f32 %v2445, %v2451
        %v2455 = vadd.f32 %v2447, %v2453
        %v2456 = vsub.f32 %v2436, %v2440
        %v2457 = vsub.f32 %v2437, %v2441
        %v2458 = vmul.f32 %v2456, 1.442695
        %v2459 = vpow.pop %v2458
        %v2460 = vmul.f32 %v2457, 1.442695
        %v2461 = vpow.pop %v2460
        %v2462 = vadd.f32 %v2454, %v2459
        %v2463 = vadd.f32 %v2455, %v2461
        %v2464 = vlog2.pop %v2462
        %v2465 = vmul.f32 %v2464, 0.6931472
        %v2466 = vlog2.pop %v2463
        %v2467 = vmul.f32 %v2466, 0.6931472
        %v2468 = vadd.f32 %v2440, %v2465
        %v2469 = vadd.f32 %v2441, %v2467
        %v2470 = vadd.f32 %v1692, %v2468
        %v2471 = vadd.f32 %v1713, %v2469
        %v2472 = vsel %vm254, %v2470, -1e+30
        %v2473 = vsel %vm255, %v2471, -1e+30
        %v2476 = vrot.slane %v2472, 7
        %v2477 = vrot.slane %v2473, 7
        %v2478 = vsel %vm2267, %v2476, %v2477
        %v2481 = vsel %vm2267, -1e+30, %v2476
        %v2482 = vrot.slane %v2472, 6
        %v2483 = vrot.slane %v2473, 6
        %v2484 = vsel %vm256, %v2482, %v2483
        %v2487 = vsel %vm256, -1e+30, %v2482
        %v2488 = vsel %vm269, %v2487, -1e+30
        %v2489 = vsel %vm270, %v2484, -1e+30
        %v2490 = vmax.f32 %v2481, %v2488
        %v2491 = vmax.f32 %v2478, %v2489
        %v2492 = vmax.f32 %v2472, %v2490
        %v2493 = vmax.f32 %v2473, %v2491
        %v2494 = vsub.f32 %v2472, %v2492
        %v2495 = vsub.f32 %v2473, %v2493
        %v2496 = vmul.f32 %v2494, 1.442695
        %v2497 = vpow.pop %v2496
        %v2498 = vmul.f32 %v2495, 1.442695
        %v2499 = vpow.pop %v2498
        %v2500 = vsub.f32 %v2481, %v2492
        %v2501 = vsub.f32 %v2478, %v2493
        %v2502 = vmul.f32 %v2500, 1.442695
        %v2503 = vpow.pop %v2502
        %v2504 = vmul.f32 %v2501, 1.442695
        %v2505 = vpow.pop %v2504
        %v2506 = vadd.f32 %v2497, %v2503
        %v2507 = vadd.f32 %v2499, %v2505
        %v2508 = vsub.f32 %v2488, %v2492
        %v2509 = vsub.f32 %v2489, %v2493
        %v2510 = vmul.f32 %v2508, 1.442695
        %v2511 = vpow.pop %v2510
        %v2512 = vmul.f32 %v2509, 1.442695
        %v2513 = vpow.pop %v2512
        %v2514 = vadd.f32 %v2506, %v2511
        %v2515 = vadd.f32 %v2507, %v2513
        %v2516 = vlog2.pop %v2514
        %v2517 = vmul.f32 %v2516, 0.6931472
        %v2518 = vlog2.pop %v2515
        %v2519 = vmul.f32 %v2518, 0.6931472
        %v2520 = vadd.f32 %v2492, %v2517
        %v2521 = vadd.f32 %v2493, %v2519
        %v2522 = vadd.f32 %v1734, %v2520
        %v2523 = vadd.f32 %v1755, %v2521
        %v2524 = vsel %vm254, %v2522, -1e+30
        %v2525 = vsel %vm255, %v2523, -1e+30
        %v2528 = vrot.slane %v2524, 7
        %v2529 = vrot.slane %v2525, 7
        %v2530 = vsel %vm2267, %v2528, %v2529
        %v2533 = vsel %vm2267, -1e+30, %v2528
        %v2534 = vrot.slane %v2524, 6
        %v2535 = vrot.slane %v2525, 6
        %v2536 = vsel %vm256, %v2534, %v2535
        %v2539 = vsel %vm256, -1e+30, %v2534
        %v2540 = vsel %vm269, %v2539, -1e+30
        %v2541 = vsel %vm270, %v2536, -1e+30
        %v2542 = vmax.f32 %v2533, %v2540
        %v2543 = vmax.f32 %v2530, %v2541
        %v2544 = vmax.f32 %v2524, %v2542
        %v2545 = vmax.f32 %v2525, %v2543
        %v2546 = vsub.f32 %v2524, %v2544
        %v2547 = vsub.f32 %v2525, %v2545
        %v2548 = vmul.f32 %v2546, 1.442695
        %v2549 = vpow.pop %v2548
        %v2550 = vmul.f32 %v2547, 1.442695
        %v2551 = vpow.pop %v2550
        %v2552 = vsub.f32 %v2533, %v2544
        %v2553 = vsub.f32 %v2530, %v2545
        %v2554 = vmul.f32 %v2552, 1.442695
        %v2555 = vpow.pop %v2554
        %v2556 = vmul.f32 %v2553, 1.442695
        %v2557 = vpow.pop %v2556
        %v2558 = vadd.f32 %v2549, %v2555
        %v2559 = vadd.f32 %v2551, %v2557
        %v2560 = vsub.f32 %v2540, %v2544
        %v2561 = vsub.f32 %v2541, %v2545
        %v2562 = vmul.f32 %v2560, 1.442695
        %v2563 = vpow.pop %v2562
        %v2564 = vmul.f32 %v2561, 1.442695
        %v2565 = vpow.pop %v2564
        %v2566 = vadd.f32 %v2558, %v2563
        %v2567 = vadd.f32 %v2559, %v2565
        %v2568 = vlog2.pop %v2566
        %v2569 = vmul.f32 %v2568, 0.6931472
        %v2570 = vlog2.pop %v2567
        %v2571 = vmul.f32 %v2570, 0.6931472
        %v2572 = vadd.f32 %v2544, %v2569
        %v2573 = vadd.f32 %v2545, %v2571
        %v2574 = vadd.f32 %v1776, %v2572
        %v2575 = vadd.f32 %v1797, %v2573
        %v2576 = vsel %vm254, %v2574, -1e+30
        %v2577 = vsel %vm255, %v2575, -1e+30
        %v2580 = vrot.slane %v2576, 7
        %v2581 = vrot.slane %v2577, 7
        %v2582 = vsel %vm2267, %v2580, %v2581
        %v2585 = vsel %vm2267, -1e+30, %v2580
        %v2586 = vrot.slane %v2576, 6
        %v2587 = vrot.slane %v2577, 6
        %v2588 = vsel %vm256, %v2586, %v2587
        %v2591 = vsel %vm256, -1e+30, %v2586
        %v2592 = vsel %vm269, %v2591, -1e+30
        %v2593 = vsel %vm270, %v2588, -1e+30
        %v2594 = vmax.f32 %v2585, %v2592
        %v2595 = vmax.f32 %v2582, %v2593
        %v2596 = vmax.f32 %v2576, %v2594
        %v2597 = vmax.f32 %v2577, %v2595
        %v2598 = vsub.f32 %v2576, %v2596
        %v2599 = vsub.f32 %v2577, %v2597
        %v2600 = vmul.f32 %v2598, 1.442695
        %v2601 = vpow.pop %v2600
        %v2602 = vmul.f32 %v2599, 1.442695
        %v2603 = vpow.pop %v2602
        %v2604 = vsub.f32 %v2585, %v2596
        %v2605 = vsub.f32 %v2582, %v2597
        %v2606 = vmul.f32 %v2604, 1.442695
        %v2607 = vpow.pop %v2606
        %v2608 = vmul.f32 %v2605, 1.442695
        %v2609 = vpow.pop %v2608
        %v2610 = vadd.f32 %v2601, %v2607
        %v2611 = vadd.f32 %v2603, %v2609
        %v2612 = vsub.f32 %v2592, %v2596
        %v2613 = vsub.f32 %v2593, %v2597
        %v2614 = vmul.f32 %v2612, 1.442695
        %v2615 = vpow.pop %v2614
        %v2616 = vmul.f32 %v2613, 1.442695
        %v2617 = vpow.pop %v2616
        %v2618 = vadd.f32 %v2610, %v2615
        %v2619 = vadd.f32 %v2611, %v2617
        %v2620 = vlog2.pop %v2618
        %v2621 = vmul.f32 %v2620, 0.6931472
        %v2622 = vlog2.pop %v2619
        %v2623 = vmul.f32 %v2622, 0.6931472
        %v2624 = vadd.f32 %v2596, %v2621
        %v2625 = vadd.f32 %v2597, %v2623
        %v2626 = vadd.f32 %v1818, %v2624
        %v2627 = vadd.f32 %v1839, %v2625
        %v2628 = vsel %vm254, %v2626, -1e+30
        %v2629 = vsel %vm255, %v2627, -1e+30
        %v2632 = vrot.slane %v2628, 7
        %v2633 = vrot.slane %v2629, 7
        %v2634 = vsel %vm2267, %v2632, %v2633
        %v2637 = vsel %vm2267, -1e+30, %v2632
        %v2638 = vrot.slane %v2628, 6
        %v2639 = vrot.slane %v2629, 6
        %v2640 = vsel %vm256, %v2638, %v2639
        %v2643 = vsel %vm256, -1e+30, %v2638
        %v2644 = vsel %vm269, %v2643, -1e+30
        %v2645 = vsel %vm270, %v2640, -1e+30
        %v2646 = vmax.f32 %v2637, %v2644
        %v2647 = vmax.f32 %v2634, %v2645
        %v2648 = vmax.f32 %v2628, %v2646
        %v2649 = vmax.f32 %v2629, %v2647
        %v2650 = vsub.f32 %v2628, %v2648
        %v2651 = vsub.f32 %v2629, %v2649
        %v2652 = vmul.f32 %v2650, 1.442695
        %v2653 = vpow.pop %v2652
        %v2654 = vmul.f32 %v2651, 1.442695
        %v2655 = vpow.pop %v2654
        %v2656 = vsub.f32 %v2637, %v2648
        %v2657 = vsub.f32 %v2634, %v2649
        %v2658 = vmul.f32 %v2656, 1.442695
        %v2659 = vpow.pop %v2658
        %v2660 = vmul.f32 %v2657, 1.442695
        %v2661 = vpow.pop %v2660
        %v2662 = vadd.f32 %v2653, %v2659
        %v2663 = vadd.f32 %v2655, %v2661
        %v2664 = vsub.f32 %v2644, %v2648
        %v2665 = vsub.f32 %v2645, %v2649
        %v2666 = vmul.f32 %v2664, 1.442695
        %v2667 = vpow.pop %v2666
        %v2668 = vmul.f32 %v2665, 1.442695
        %v2669 = vpow.pop %v2668
        %v2670 = vadd.f32 %v2662, %v2667
        %v2671 = vadd.f32 %v2663, %v2669
        %v2672 = vlog2.pop %v2670
        %v2673 = vmul.f32 %v2672, 0.6931472
        %v2674 = vlog2.pop %v2671
        %v2675 = vmul.f32 %v2674, 0.6931472
        %v2676 = vadd.f32 %v2648, %v2673
        %v2677 = vadd.f32 %v2649, %v2675
        %v2678 = vadd.f32 %v1860, %v2676
        %v2679 = vadd.f32 %v1881, %v2677
        %v2680 = vsel %vm254, %v2678, -1e+30
        %v2681 = vsel %vm255, %v2679, -1e+30
        %2682 = vst.msk [vmem:[#allocation2] sm:$0xff] %vm1545, %v2680
        %2683 = vst.msk [vmem:[#allocation2 + $0x8] sm:$0xff] %vm1545, %v2681
      $region40: #{ctc_loss_pallas.1} parent=31 // pred_fallthru
        _
      %p2684 = scmp.eq.s32.totalorder %s19, 1
      // Predicated region
      $region41: #{ctc_loss_pallas.1} parent=31 // pred_check
        %p2685 = pneg %p2684
      $region42: #{ctc_loss_pallas.1} parent=31 // pred_check_branch
        %2687 = sbr.rel (%p2685) target = $region44
      $region43: #{ctc_loss_pallas.1} parent=31 // pred_region
        %v2688 = vld [vmem:[#allocation2] sm:$0xff]
        %v2689 = vld [vmem:[#allocation2 + $0x8] sm:$0xff]
        %v2690 = vlaneseq
        %v2691 = vshrl.u32 %v2690, 7
        %v2692 = vsub.s32 0, %v2691
        %v2693 = vrot.slane %v248, %v2692
        %vm2694 = vcmp.eq.s32.totalorder %v246, %v2693
        %vm2695 = vcmp.eq.s32.totalorder %v247, %v2693
        %v2696 = vsub.s32 %v248, 1
        %v2697 = vlaneseq
        %v2698 = vshrl.u32 %v2697, 7
        %v2699 = vsub.s32 0, %v2698
        %v2700 = vrot.slane %v2696, %v2699
        %vm2701 = vcmp.eq.s32.totalorder %v246, %v2700
        %vm2702 = vcmp.eq.s32.totalorder %v247, %v2700
        %vm2703 = vmor %vm2694, %vm2701
        %vm2704 = vmor %vm2695, %vm2702
        %v2705 = vsel %vm2703, %v2688, -1e+30
        %v2706 = vsel %vm2704, %v2689, -1e+30
        %v2707 = vsel %vm1545, %v2705, -inf
        %v2708 = vsel %vm1545, %v2706, -inf
        %v2709 = vmax.f32 %v2707, %v2708
        %v2710 = vrot.slane %v2709, 4
        %v2711 = vmax.f32 %v2709, %v2710
        %v2712 = vrot.slane %v2711, 2
        %v2713 = vmax.f32 %v2711, %v2712
        %v2714 = vrot.slane %v2713, 1
        %v2715 = vmax.f32 %v2713, %v2714
        %v2716 = vsub.f32 %v2705, %v2715
        %v2717 = vsub.f32 %v2706, %v2715
        %v2718 = vmul.f32 %v2716, 1.442695
        %v2719 = vpow.pop %v2718
        %v2720 = vmul.f32 %v2717, 1.442695
        %v2721 = vpow.pop %v2720
        %v2722 = vsel %vm1545, %v2719, 0.0
        %v2723 = vsel %vm1545, %v2721, 0.0
        %v2724 = vadd.f32 %v2722, %v2723
        %v2725 = vrot.slane %v2724, 4
        %v2726 = vadd.f32 %v2724, %v2725
        %v2727 = vrot.slane %v2726, 2
        %v2728 = vadd.f32 %v2726, %v2727
        %v2729 = vrot.slane %v2728, 1
        %v2730 = vadd.f32 %v2728, %v2729
        %v2731 = vlog2.pop %v2730
        %v2732 = vmul.f32 %v2731, 0.6931472
        %v2733 = vadd.f32 %v2715, %v2732
        %vm2734 = vcmp.lt.f32.partialorder %v2733, -1e+29
        %v2735 = vsub.f32 0.0, %v2733
        %v2736 = vsel %vm2734, 0.0, %v2735
        %vm2737 = vcmp.gt.s32.totalorder %v244, 1
        %v2738 = vsel %vm2737, %v244, 1
        %v2739 = vcvt.s32.f32 %v2738
        %v2740 = vrcp.pop %v2739
        %v2741 = vmul.f32 %v2736, %v2740
        %vm2742 = vcmask 24576
        %2743 = vst.msk [vmem:[%s225] sm:$0x1] %vm2742, %v2741
      $region44: #{ctc_loss_pallas.1} parent=31 // pred_fallthru
        _
      %p2744 = scmp.lt.s32.totalorder %s18, 0
      %s2745 = scalar_select %p2744, %s18, 0
      %s2746 = scalar_lea.vmem %s3, %s2745
      // Predicated region
      $region45: #{ctc_loss_pallas.1} parent=31 // pred_check
        %p2747 = pneg %p124
      $region46: #{ctc_loss_pallas.1} parent=31 // pred_check_branch
        %2749 = sbr.rel (%p2747) target = $region48
      $region47: #{ctc_loss_pallas.1} parent=31 // pred_region
        _
      $region48: #{ctc_loss_pallas.1} parent=31 // pred_fallthru
        _
      // Predicated region
      $region49: #{ctc_loss_pallas.1} parent=31 // pred_check
        %p2750 = pneg %p124
      $region50: #{ctc_loss_pallas.1} parent=31 // pred_check_branch
        %2752 = sbr.rel (%p2750) target = $region52
      $region51: #{ctc_loss_pallas.1} parent=31 // pred_region
        %p2753 = scmp.lt.s32.totalorder %s18, 0
        %s2754 = scalar_select %p2753, %s18, 0
        %s2755 = scalar_lea.vmem %s3, %s2754
      $region52: #{ctc_loss_pallas.1} parent=31 // pred_fallthru
        _
    $region32: #{ctc_loss_pallas.1} parent=5 // pred_fallthru
      _
    %p2756 = scmp.le.s32.totalorder 2, %s9
    // Predicated region
    $region53: #{ctc_loss_pallas.1} parent=5 // pred_check
      %p2757 = pneg %p2756
    $region54: #{ctc_loss_pallas.1} parent=5 // pred_check_branch
      %2759 = sbr.rel (%p2757) target = $region56
    $region55: #{ctc_loss_pallas.1} parent=5 // pred_region
      %s2760 = ssub.s32 %s9, 2
    $region56: #{ctc_loss_pallas.1} parent=5 // pred_fallthru
      _
  $region6: #{ctc_loss_pallas.1} parent=0 // loop_footer
    %s13 = sadd.s32 1, %s9
  $region7: #{ctc_loss_pallas.1} parent=0 // loop_footer_branch
    %8 = sbr.rel target = $region3
  $region8: #{ctc_loss_pallas.1} parent=0 // loop_exit
    _

</llo_original>
